<compile_context>
chip_gen: v5e
topology: v5e:2x2
jax: 0.10.0
libtpu: 0.0.40
codegen_flags: <defaults>
</compile_context>

<pallas_src>
import functools
from typing import NamedTuple

import jax
import jax.numpy as jnp
from jax.experimental import pallas as pl
from jax.experimental.pallas import tpu as pltpu


def _round_up(v, m):
    return (v + m - 1) // m * m


class SpectralPlan(NamedTuple):
    cin: int
    cout: int
    modes1: int
    modes2: int
    modes3: int
    cin_p: int     # padded Cin  (sublane-dense, multiple of 8)
    cout_p: int    # padded Cout (multiple of 8)
    m: int         # modes1 * modes2 * modes3
    m_p: int       # padded flattened mode count (multiple of tm)
    tm: int        # lane tile (multiple of 128)
    tci: int       # Cin chunk per reduction grid step


def plan_spectral_conv3d(cin, cout, modes1, modes2, modes3, batch,
                         vmem_tile_budget_bytes=40 * 1024 * 1024):
    """Pick padded sizes and tile sizes once, at parameter-setup time."""
    m = modes1 * modes2 * modes3
    cin_p = _round_up(cin, 8)
    cout_p = _round_up(cout, 8)

    # Lane tile: as large as possible (the kernel is HBM-bound), but keep at
    # least 2 m-tiles when that does not shrink the tile below 256 lanes —
    # the m axis is the only "parallel" axis and is what feeds v7x's two TCs.
    tm = min(1024, _round_up(m, 128))
    if _round_up(m, tm) == tm and tm > 256:
        tm = max(256, _round_up(tm // 2, 128))

    # Cin chunk: cover the whole padded Cin when possible so the reduction
    # grid axis has a single step (output written once, no RMW); cap at 32.
    tci = min(cin_p, 32)

    def footprint(tm_, tci_):
        x = 2 * 2 * batch * tci_ * tm_ * 4           # r/i, double-buffered
        w = 2 * 2 * tci_ * cout_p * tm_ * 4
        o = 2 * 2 * batch * cout_p * tm_ * 4
        return x + w + o

    # Budget for the smallest-VMEM generation (v7x: 64 MiB physical per TC).
    while footprint(tm, tci) > vmem_tile_budget_bytes and tm > 256:
        tm = max(256, _round_up(tm // 2, 128))
    while footprint(tm, tci) > vmem_tile_budget_bytes and tci > 8:
        tci = max(8, tci // 2)

    m_p = _round_up(m, tm)
    return SpectralPlan(cin, cout, modes1, modes2, modes3,
                        cin_p, cout_p, m, m_p, tm, tci)


def prepare_spectral_weights(weights, plan):
    """One-time parameter reformat: split r/i, flatten modes last, pad.

    Hoisted out of the per-call forward so the reshape/pad is not repeated.
    """
    wr = jnp.real(weights).reshape(plan.cin, plan.cout, plan.m).astype(jnp.float32)
    wi = jnp.imag(weights).reshape(plan.cin, plan.cout, plan.m).astype(jnp.float32)
    pad = ((0, plan.cin_p - plan.cin),
           (0, plan.cout_p - plan.cout),
           (0, plan.m_p - plan.m))
    return jnp.pad(wr, pad), jnp.pad(wi, pad)


def _compl_mul_kernel(xr_ref, xi_ref, wr_ref, wi_ref, or_ref, oi_ref,
                      *, single_k, tco, tl):
    """One (m-tile, Cin-chunk) grid step of out[b,o,m] = sum_i x[b,i,m]*w[i,o,m].

    xr/xi : (B, tci, tm)     real / imag low-mode spectrum chunk
    wr/wi : (tci, Cop, tm)   real / imag spectral-weight chunk
    or/oi : (B, Cop, tm)     output tile (resident across the Cin grid axis)

    Sub-blocked so the live accumulator is a handful of vregs: for each
    (batch b, Cout chunk of `tco`, lane chunk of `tl`) the whole Cin chunk is
    accumulated in registers and stored exactly once (lane-dense vst, no
    zero-init / read-modify-write of the full tile).
    """
    B, tci, tm = xr_ref.shape
    cop = wr_ref.shape[1]

    for b in range(B):                              # static, small
        for co0 in range(0, cop, tco):              # static Cout sub-blocks
            csl = slice(co0, co0 + tco)
            for l0 in range(0, tm, tl):             # static lane sub-blocks
                lsl = slice(l0, l0 + tl)
                accr = jnp.zeros((tco, tl), jnp.float32)
                acci = jnp.zeros((tco, tl), jnp.float32)
                for i in range(tci):                # static Cin chunk
                    # TODO(synk): a stride-0 sublane-broadcast load
                    # (pl.ds(i, tco, stride=0)) would fold this broadcast
                    # into the vld for free.
                    xr = jnp.broadcast_to(xr_ref[b, i:i + 1, lsl], (tco, tl))
                    xi = jnp.broadcast_to(xi_ref[b, i:i + 1, lsl], (tco, tl))
                    wr = wr_ref[i, csl, lsl]
                    wi = wi_ref[i, csl, lsl]
                    # (a + ib)(c + id) = (ac - bd) + i(ad + bc)
                    accr = accr + (xr * wr - xi * wi)
                    acci = acci + (xr * wi + xi * wr)

                if single_k:
                    # Single reduction step: write directly, no RMW.
                    or_ref[b, csl, lsl] = accr
                    oi_ref[b, csl, lsl] = acci
                else:
                    k = pl.program_id(1)

                    @pl.when(k == 0)
                    def _store():
                        or_ref[b, csl, lsl] = accr
                        oi_ref[b, csl, lsl] = acci

                    @pl.when(k > 0)
                    def _accum():
                        or_ref[b, csl, lsl] += accr
                        oi_ref[b, csl, lsl] += acci


def _spectral_contract(xr, xi, wr, wi, plan):
    """out[b,o,m] = sum_i (xr+i*xi)[b,i,m] * (wr+i*wi)[i,o,m] on padded layout."""
    B = xr.shape[0]
    n_m = plan.m_p // plan.tm
    n_k = plan.cin_p // plan.tci
    tl = plan.tm if plan.tm <= 512 else 512
    tco = min(plan.cout_p, 8)

    kernel = functools.partial(_compl_mul_kernel,
                               single_k=(n_k == 1), tco=tco, tl=tl)

    x_spec = pl.BlockSpec((B, plan.tci, plan.tm), lambda m, k: (0, k, m))
    w_spec = pl.BlockSpec((plan.tci, plan.cout_p, plan.tm), lambda m, k: (k, 0, m))
    o_spec = pl.BlockSpec((B, plan.cout_p, plan.tm), lambda m, k: (0, 0, m))

    out_shape = (jax.ShapeDtypeStruct((B, plan.cout_p, plan.m_p), jnp.float32),
                 jax.ShapeDtypeStruct((B, plan.cout_p, plan.m_p), jnp.float32))

    return pl.pallas_call(
        kernel,
        out_shape=out_shape,
        grid_spec=pltpu.PrefetchScalarGridSpec(
            num_scalar_prefetch=0,
            grid=(n_m, n_k),                         # Cin reduction axis last
            in_specs=[x_spec, x_spec, w_spec, w_spec],
            out_specs=[o_spec, o_spec],
        ),
        compiler_params=pltpu.CompilerParams(
            # m tiles are independent -> "parallel" (2 TCs on v7x);
            # Cin reduces into a resident output tile -> "arbitrary" (last).
            dimension_semantics=("parallel", "arbitrary"),
            vmem_limit_bytes=64 * 1024 * 1024,
        ),
    )(xr, xi, wr, wi)


def spectral_conv3d(x, wr_p, wi_p, plan):
    """Forward pass of SpectralConv3d.

    x            : (B, Cin, D1, D2, D3) float32 (NCDHW, as in the torch module)
    wr_p / wi_p  : pre-padded real/imag weights from prepare_spectral_weights
    returns      : (B, Cout, D1, D2, D3) float32
    """
    B, Cin, D1, D2, D3 = x.shape
    m1, m2, m3 = plan.modes1, plan.modes2, plan.modes3

    # TODO(synk): FFT stays in XLA — no Pallas TPU FFT primitive.
    x_ft = jnp.fft.rfftn(x, axes=(-3, -2, -1))        # (B, Cin, D1, D2, D3//2+1)
    x_low = x_ft[:, :, :m1, :m2, :m3]

    xr = jnp.real(x_low).reshape(B, Cin, plan.m).astype(jnp.float32)
    xi = jnp.imag(x_low).reshape(B, Cin, plan.m).astype(jnp.float32)
    pad = ((0, 0), (0, plan.cin_p - Cin), (0, plan.m_p - plan.m))
    xr = jnp.pad(xr, pad)
    xi = jnp.pad(xi, pad)

    out_r, out_i = _spectral_contract(xr, xi, wr_p, wi_p, plan)

    out_r = out_r[:, :plan.cout, :plan.m].reshape(B, plan.cout, m1, m2, m3)
    out_i = out_i[:, :plan.cout, :plan.m].reshape(B, plan.cout, m1, m2, m3)

    # Zero-filled full spectrum with the low-frequency corner set, assembled
    # from f32 real/imag planes with a single complex materialization.
    d3r = D3 // 2 + 1
    zeros = jnp.zeros((B, plan.cout, D1, D2, d3r), jnp.float32)
    ftr = jax.lax.dynamic_update_slice(zeros, out_r, (0, 0, 0, 0, 0))
    fti = jax.lax.dynamic_update_slice(zeros, out_i, (0, 0, 0, 0, 0))
    out_ft = jax.lax.complex(ftr, fti)

    y = jnp.fft.irfftn(out_ft, s=(D1, D2, D3), axes=(-3, -2, -1))
    return y.astype(jnp.float32)


def _reference_spectral_conv3d(x, weights, modes1, modes2, modes3):
    """Pure-JAX reference (mirrors the PyTorch forward) for verification."""
    B = x.shape[0]
    Cout = weights.shape[1]
    D1, D2, D3 = x.shape[-3:]
    x_ft = jnp.fft.rfftn(x, axes=(-3, -2, -1))
    low = jnp.einsum('bixyz,ioxyz->boxyz',
                     x_ft[:, :, :modes1, :modes2, :modes3], weights)
    out_ft = jnp.zeros((B, Cout, D1, D2, D3 // 2 + 1), dtype=jnp.complex64)
    out_ft = out_ft.at[:, :, :modes1, :modes2, :modes3].set(low)
    return jnp.fft.irfftn(out_ft, s=(D1, D2, D3), axes=(-3, -2, -1)).astype(jnp.float32)


if __name__ == "__main__":
    # Small deterministic configuration (exercises m tiling + channel padding).
    B, Cin, Cout = 2, 4, 4
    D1, D2, D3 = 16, 16, 16
    modes1, modes2, modes3 = 8, 8, 5   # modes3 <= D3//2 + 1 ; M = 320

    key = jax.random.PRNGKey(0)
    kx, kwr, kwi = jax.random.split(key, 3)

    x = jax.random.normal(kx, (B, Cin, D1, D2, D3), dtype=jnp.float32)

    # Parameter init mirroring: scale * torch.rand(Cin, Cout, m1, m2, m3, cfloat).
    scale = 1.0 / (Cin * Cout)
    w_shape = (Cin, Cout, modes1, modes2, modes3)
    w_real = scale * jax.random.uniform(kwr, w_shape, dtype=jnp.float32)
    w_imag = scale * jax.random.uniform(kwi, w_shape, dtype=jnp.float32)
    weights = (w_real + 1j * w_imag).astype(jnp.complex64)

    # One-time setup: tiling plan + padded/split weights (outside the jit path).
    plan = plan_spectral_conv3d(Cin, Cout, modes1, modes2, modes3, batch=B)
    wr_p, wi_p = prepare_spectral_weights(weights, plan)
    wr_p, wi_p = jax.block_until_ready((wr_p, wi_p))

    fwd = jax.jit(functools.partial(spectral_conv3d, plan=plan))
    y = fwd(x, wr_p, wi_p)
    jax.block_until_ready(y)

    y_ref = _reference_spectral_conv3d(x, weights, modes1, modes2, modes3)
    jax.block_until_ready(y_ref)

    assert y.shape == (B, Cout, D1, D2, D3), y.shape
    assert jnp.allclose(y, y_ref, atol=2e-5, rtol=1e-5), \
        float(jnp.max(jnp.abs(y - y_ref)))

    print("KERNEL_OK")
</pallas_src>

<mosaic_0001>
module attributes {stable_mosaic.version = 11 : i64} {
  func.func @_compl_mul_kernel(%arg0: i32, %arg1: i32, %arg2: memref<2x8x256xf32, #tpu.memory_space<vmem>>, %arg3: memref<2x8x256xf32, #tpu.memory_space<vmem>>, %arg4: memref<8x8x256xf32, #tpu.memory_space<vmem>>, %arg5: memref<8x8x256xf32, #tpu.memory_space<vmem>>, %arg6: memref<2x8x256xf32, #tpu.memory_space<vmem>>, %arg7: memref<2x8x256xf32, #tpu.memory_space<vmem>>) attributes {dimension_semantics = [#tpu.dimension_semantics<parallel>, #tpu.dimension_semantics<arbitrary>], iteration_bounds = array<i64: 2, 1>, scalar_prefetch = 0 : i64, scratch_operands = 0 : i64, tpu.core_type = #tpu.core_type<tc>, window_params = [{transform_indices = @transform_0, window_bounds = array<i64: 2, 8, 256>}, {transform_indices = @transform_1, window_bounds = array<i64: 2, 8, 256>}, {transform_indices = @transform_2, window_bounds = array<i64: 8, 8, 256>}, {transform_indices = @transform_3, window_bounds = array<i64: 8, 8, 256>}, {transform_indices = @transform_4, window_bounds = array<i64: 2, 8, 256>}, {transform_indices = @transform_5, window_bounds = array<i64: 2, 8, 256>}]} {
    %cst = arith.constant 0.000000e+00 : f32
    %0 = vector.broadcast %cst : f32 to vector<8x256xf32>
    %cst_0 = arith.constant 0.000000e+00 : f32
    %1 = vector.broadcast %cst_0 : f32 to vector<8x256xf32>
    %c0 = arith.constant 0 : index
    %c0_1 = arith.constant 0 : index
    %c0_2 = arith.constant 0 : index
    %2 = vector.load %arg2[%c0, %c0_1, %c0_2] : memref<2x8x256xf32, #tpu.memory_space<vmem>>, vector<1x1x256xf32>
    %3 = vector.shape_cast %2 : vector<1x1x256xf32> to vector<1x256xf32>
    %4 = vector.shape_cast %3 : vector<1x256xf32> to vector<1x256xf32>
    %5 = vector.broadcast %4 : vector<1x256xf32> to vector<8x256xf32>
    %c0_3 = arith.constant 0 : index
    %c0_4 = arith.constant 0 : index
    %c0_5 = arith.constant 0 : index
    %6 = vector.load %arg3[%c0_3, %c0_4, %c0_5] : memref<2x8x256xf32, #tpu.memory_space<vmem>>, vector<1x1x256xf32>
    %7 = vector.shape_cast %6 : vector<1x1x256xf32> to vector<1x256xf32>
    %8 = vector.shape_cast %7 : vector<1x256xf32> to vector<1x256xf32>
    %9 = vector.broadcast %8 : vector<1x256xf32> to vector<8x256xf32>
    %c0_6 = arith.constant 0 : index
    %c0_7 = arith.constant 0 : index
    %c0_8 = arith.constant 0 : index
    %10 = vector.load %arg4[%c0_6, %c0_7, %c0_8] : memref<8x8x256xf32, #tpu.memory_space<vmem>>, vector<1x8x256xf32>
    %11 = vector.shape_cast %10 : vector<1x8x256xf32> to vector<8x256xf32>
    %c0_9 = arith.constant 0 : index
    %c0_10 = arith.constant 0 : index
    %c0_11 = arith.constant 0 : index
    %12 = vector.load %arg5[%c0_9, %c0_10, %c0_11] : memref<8x8x256xf32, #tpu.memory_space<vmem>>, vector<1x8x256xf32>
    %13 = vector.shape_cast %12 : vector<1x8x256xf32> to vector<8x256xf32>
    %14 = arith.mulf %5, %11 : vector<8x256xf32>
    %15 = arith.mulf %9, %13 : vector<8x256xf32>
    %16 = arith.subf %14, %15 : vector<8x256xf32>
    %17 = arith.addf %0, %16 : vector<8x256xf32>
    %18 = arith.mulf %5, %13 : vector<8x256xf32>
    %19 = arith.mulf %9, %11 : vector<8x256xf32>
    %20 = arith.addf %18, %19 : vector<8x256xf32>
    %21 = arith.addf %1, %20 : vector<8x256xf32>
    %c0_12 = arith.constant 0 : index
    %c1 = arith.constant 1 : index
    %c0_13 = arith.constant 0 : index
    %22 = vector.load %arg2[%c0_12, %c1, %c0_13] : memref<2x8x256xf32, #tpu.memory_space<vmem>>, vector<1x1x256xf32>
    %23 = vector.shape_cast %22 : vector<1x1x256xf32> to vector<1x256xf32>
    %24 = vector.shape_cast %23 : vector<1x256xf32> to vector<1x256xf32>
    %25 = vector.broadcast %24 : vector<1x256xf32> to vector<8x256xf32>
    %c0_14 = arith.constant 0 : index
    %c1_15 = arith.constant 1 : index
    %c0_16 = arith.constant 0 : index
    %26 = vector.load %arg3[%c0_14, %c1_15, %c0_16] : memref<2x8x256xf32, #tpu.memory_space<vmem>>, vector<1x1x256xf32>
    %27 = vector.shape_cast %26 : vector<1x1x256xf32> to vector<1x256xf32>
    %28 = vector.shape_cast %27 : vector<1x256xf32> to vector<1x256xf32>
    %29 = vector.broadcast %28 : vector<1x256xf32> to vector<8x256xf32>
    %c1_17 = arith.constant 1 : index
    %c0_18 = arith.constant 0 : index
    %c0_19 = arith.constant 0 : index
    %30 = vector.load %arg4[%c1_17, %c0_18, %c0_19] : memref<8x8x256xf32, #tpu.memory_space<vmem>>, vector<1x8x256xf32>
    %31 = vector.shape_cast %30 : vector<1x8x256xf32> to vector<8x256xf32>
    %c1_20 = arith.constant 1 : index
    %c0_21 = arith.constant 0 : index
    %c0_22 = arith.constant 0 : index
    %32 = vector.load %arg5[%c1_20, %c0_21, %c0_22] : memref<8x8x256xf32, #tpu.memory_space<vmem>>, vector<1x8x256xf32>
    %33 = vector.shape_cast %32 : vector<1x8x256xf32> to vector<8x256xf32>
    %34 = arith.mulf %25, %31 : vector<8x256xf32>
    %35 = arith.mulf %29, %33 : vector<8x256xf32>
    %36 = arith.subf %34, %35 : vector<8x256xf32>
    %37 = arith.addf %17, %36 : vector<8x256xf32>
    %38 = arith.mulf %25, %33 : vector<8x256xf32>
    %39 = arith.mulf %29, %31 : vector<8x256xf32>
    %40 = arith.addf %38, %39 : vector<8x256xf32>
    %41 = arith.addf %21, %40 : vector<8x256xf32>
    %c0_23 = arith.constant 0 : index
    %c2 = arith.constant 2 : index
    %c0_24 = arith.constant 0 : index
    %42 = vector.load %arg2[%c0_23, %c2, %c0_24] : memref<2x8x256xf32, #tpu.memory_space<vmem>>, vector<1x1x256xf32>
    %43 = vector.shape_cast %42 : vector<1x1x256xf32> to vector<1x256xf32>
    %44 = vector.shape_cast %43 : vector<1x256xf32> to vector<1x256xf32>
    %45 = vector.broadcast %44 : vector<1x256xf32> to vector<8x256xf32>
    %c0_25 = arith.constant 0 : index
    %c2_26 = arith.constant 2 : index
    %c0_27 = arith.constant 0 : index
    %46 = vector.load %arg3[%c0_25, %c2_26, %c0_27] : memref<2x8x256xf32, #tpu.memory_space<vmem>>, vector<1x1x256xf32>
    %47 = vector.shape_cast %46 : vector<1x1x256xf32> to vector<1x256xf32>
    %48 = vector.shape_cast %47 : vector<1x256xf32> to vector<1x256xf32>
    %49 = vector.broadcast %48 : vector<1x256xf32> to vector<8x256xf32>
    %c2_28 = arith.constant 2 : index
    %c0_29 = arith.constant 0 : index
    %c0_30 = arith.constant 0 : index
    %50 = vector.load %arg4[%c2_28, %c0_29, %c0_30] : memref<8x8x256xf32, #tpu.memory_space<vmem>>, vector<1x8x256xf32>
    %51 = vector.shape_cast %50 : vector<1x8x256xf32> to vector<8x256xf32>
    %c2_31 = arith.constant 2 : index
    %c0_32 = arith.constant 0 : index
    %c0_33 = arith.constant 0 : index
    %52 = vector.load %arg5[%c2_31, %c0_32, %c0_33] : memref<8x8x256xf32, #tpu.memory_space<vmem>>, vector<1x8x256xf32>
    %53 = vector.shape_cast %52 : vector<1x8x256xf32> to vector<8x256xf32>
    %54 = arith.mulf %45, %51 : vector<8x256xf32>
    %55 = arith.mulf %49, %53 : vector<8x256xf32>
    %56 = arith.subf %54, %55 : vector<8x256xf32>
    %57 = arith.addf %37, %56 : vector<8x256xf32>
    %58 = arith.mulf %45, %53 : vector<8x256xf32>
    %59 = arith.mulf %49, %51 : vector<8x256xf32>
    %60 = arith.addf %58, %59 : vector<8x256xf32>
    %61 = arith.addf %41, %60 : vector<8x256xf32>
    %c0_34 = arith.constant 0 : index
    %c3 = arith.constant 3 : index
    %c0_35 = arith.constant 0 : index
    %62 = vector.load %arg2[%c0_34, %c3, %c0_35] : memref<2x8x256xf32, #tpu.memory_space<vmem>>, vector<1x1x256xf32>
    %63 = vector.shape_cast %62 : vector<1x1x256xf32> to vector<1x256xf32>
    %64 = vector.shape_cast %63 : vector<1x256xf32> to vector<1x256xf32>
    %65 = vector.broadcast %64 : vector<1x256xf32> to vector<8x256xf32>
    %c0_36 = arith.constant 0 : index
    %c3_37 = arith.constant 3 : index
    %c0_38 = arith.constant 0 : index
    %66 = vector.load %arg3[%c0_36, %c3_37, %c0_38] : memref<2x8x256xf32, #tpu.memory_space<vmem>>, vector<1x1x256xf32>
    %67 = vector.shape_cast %66 : vector<1x1x256xf32> to vector<1x256xf32>
    %68 = vector.shape_cast %67 : vector<1x256xf32> to vector<1x256xf32>
    %69 = vector.broadcast %68 : vector<1x256xf32> to vector<8x256xf32>
    %c3_39 = arith.constant 3 : index
    %c0_40 = arith.constant 0 : index
    %c0_41 = arith.constant 0 : index
    %70 = vector.load %arg4[%c3_39, %c0_40, %c0_41] : memref<8x8x256xf32, #tpu.memory_space<vmem>>, vector<1x8x256xf32>
    %71 = vector.shape_cast %70 : vector<1x8x256xf32> to vector<8x256xf32>
    %c3_42 = arith.constant 3 : index
    %c0_43 = arith.constant 0 : index
    %c0_44 = arith.constant 0 : index
    %72 = vector.load %arg5[%c3_42, %c0_43, %c0_44] : memref<8x8x256xf32, #tpu.memory_space<vmem>>, vector<1x8x256xf32>
    %73 = vector.shape_cast %72 : vector<1x8x256xf32> to vector<8x256xf32>
    %74 = arith.mulf %65, %71 : vector<8x256xf32>
    %75 = arith.mulf %69, %73 : vector<8x256xf32>
    %76 = arith.subf %74, %75 : vector<8x256xf32>
    %77 = arith.addf %57, %76 : vector<8x256xf32>
    %78 = arith.mulf %65, %73 : vector<8x256xf32>
    %79 = arith.mulf %69, %71 : vector<8x256xf32>
    %80 = arith.addf %78, %79 : vector<8x256xf32>
    %81 = arith.addf %61, %80 : vector<8x256xf32>
    %c0_45 = arith.constant 0 : index
    %c4 = arith.constant 4 : index
    %c0_46 = arith.constant 0 : index
    %82 = vector.load %arg2[%c0_45, %c4, %c0_46] : memref<2x8x256xf32, #tpu.memory_space<vmem>>, vector<1x1x256xf32>
    %83 = vector.shape_cast %82 : vector<1x1x256xf32> to vector<1x256xf32>
    %84 = vector.shape_cast %83 : vector<1x256xf32> to vector<1x256xf32>
    %85 = vector.broadcast %84 : vector<1x256xf32> to vector<8x256xf32>
    %c0_47 = arith.constant 0 : index
    %c4_48 = arith.constant 4 : index
    %c0_49 = arith.constant 0 : index
    %86 = vector.load %arg3[%c0_47, %c4_48, %c0_49] : memref<2x8x256xf32, #tpu.memory_space<vmem>>, vector<1x1x256xf32>
    %87 = vector.shape_cast %86 : vector<1x1x256xf32> to vector<1x256xf32>
    %88 = vector.shape_cast %87 : vector<1x256xf32> to vector<1x256xf32>
    %89 = vector.broadcast %88 : vector<1x256xf32> to vector<8x256xf32>
    %c4_50 = arith.constant 4 : index
    %c0_51 = arith.constant 0 : index
    %c0_52 = arith.constant 0 : index
    %90 = vector.load %arg4[%c4_50, %c0_51, %c0_52] : memref<8x8x256xf32, #tpu.memory_space<vmem>>, vector<1x8x256xf32>
    %91 = vector.shape_cast %90 : vector<1x8x256xf32> to vector<8x256xf32>
    %c4_53 = arith.constant 4 : index
    %c0_54 = arith.constant 0 : index
    %c0_55 = arith.constant 0 : index
    %92 = vector.load %arg5[%c4_53, %c0_54, %c0_55] : memref<8x8x256xf32, #tpu.memory_space<vmem>>, vector<1x8x256xf32>
    %93 = vector.shape_cast %92 : vector<1x8x256xf32> to vector<8x256xf32>
    %94 = arith.mulf %85, %91 : vector<8x256xf32>
    %95 = arith.mulf %89, %93 : vector<8x256xf32>
    %96 = arith.subf %94, %95 : vector<8x256xf32>
    %97 = arith.addf %77, %96 : vector<8x256xf32>
    %98 = arith.mulf %85, %93 : vector<8x256xf32>
    %99 = arith.mulf %89, %91 : vector<8x256xf32>
    %100 = arith.addf %98, %99 : vector<8x256xf32>
    %101 = arith.addf %81, %100 : vector<8x256xf32>
    %c0_56 = arith.constant 0 : index
    %c5 = arith.constant 5 : index
    %c0_57 = arith.constant 0 : index
    %102 = vector.load %arg2[%c0_56, %c5, %c0_57] : memref<2x8x256xf32, #tpu.memory_space<vmem>>, vector<1x1x256xf32>
    %103 = vector.shape_cast %102 : vector<1x1x256xf32> to vector<1x256xf32>
    %104 = vector.shape_cast %103 : vector<1x256xf32> to vector<1x256xf32>
    %105 = vector.broadcast %104 : vector<1x256xf32> to vector<8x256xf32>
    %c0_58 = arith.constant 0 : index
    %c5_59 = arith.constant 5 : index
    %c0_60 = arith.constant 0 : index
    %106 = vector.load %arg3[%c0_58, %c5_59, %c0_60] : memref<2x8x256xf32, #tpu.memory_space<vmem>>, vector<1x1x256xf32>
    %107 = vector.shape_cast %106 : vector<1x1x256xf32> to vector<1x256xf32>
    %108 = vector.shape_cast %107 : vector<1x256xf32> to vector<1x256xf32>
    %109 = vector.broadcast %108 : vector<1x256xf32> to vector<8x256xf32>
    %c5_61 = arith.constant 5 : index
    %c0_62 = arith.constant 0 : index
    %c0_63 = arith.constant 0 : index
    %110 = vector.load %arg4[%c5_61, %c0_62, %c0_63] : memref<8x8x256xf32, #tpu.memory_space<vmem>>, vector<1x8x256xf32>
    %111 = vector.shape_cast %110 : vector<1x8x256xf32> to vector<8x256xf32>
    %c5_64 = arith.constant 5 : index
    %c0_65 = arith.constant 0 : index
    %c0_66 = arith.constant 0 : index
    %112 = vector.load %arg5[%c5_64, %c0_65, %c0_66] : memref<8x8x256xf32, #tpu.memory_space<vmem>>, vector<1x8x256xf32>
    %113 = vector.shape_cast %112 : vector<1x8x256xf32> to vector<8x256xf32>
    %114 = arith.mulf %105, %111 : vector<8x256xf32>
    %115 = arith.mulf %109, %113 : vector<8x256xf32>
    %116 = arith.subf %114, %115 : vector<8x256xf32>
    %117 = arith.addf %97, %116 : vector<8x256xf32>
    %118 = arith.mulf %105, %113 : vector<8x256xf32>
    %119 = arith.mulf %109, %111 : vector<8x256xf32>
    %120 = arith.addf %118, %119 : vector<8x256xf32>
    %121 = arith.addf %101, %120 : vector<8x256xf32>
    %c0_67 = arith.constant 0 : index
    %c6 = arith.constant 6 : index
    %c0_68 = arith.constant 0 : index
    %122 = vector.load %arg2[%c0_67, %c6, %c0_68] : memref<2x8x256xf32, #tpu.memory_space<vmem>>, vector<1x1x256xf32>
    %123 = vector.shape_cast %122 : vector<1x1x256xf32> to vector<1x256xf32>
    %124 = vector.shape_cast %123 : vector<1x256xf32> to vector<1x256xf32>
    %125 = vector.broadcast %124 : vector<1x256xf32> to vector<8x256xf32>
    %c0_69 = arith.constant 0 : index
    %c6_70 = arith.constant 6 : index
    %c0_71 = arith.constant 0 : index
    %126 = vector.load %arg3[%c0_69, %c6_70, %c0_71] : memref<2x8x256xf32, #tpu.memory_space<vmem>>, vector<1x1x256xf32>
    %127 = vector.shape_cast %126 : vector<1x1x256xf32> to vector<1x256xf32>
    %128 = vector.shape_cast %127 : vector<1x256xf32> to vector<1x256xf32>
    %129 = vector.broadcast %128 : vector<1x256xf32> to vector<8x256xf32>
    %c6_72 = arith.constant 6 : index
    %c0_73 = arith.constant 0 : index
    %c0_74 = arith.constant 0 : index
    %130 = vector.load %arg4[%c6_72, %c0_73, %c0_74] : memref<8x8x256xf32, #tpu.memory_space<vmem>>, vector<1x8x256xf32>
    %131 = vector.shape_cast %130 : vector<1x8x256xf32> to vector<8x256xf32>
    %c6_75 = arith.constant 6 : index
    %c0_76 = arith.constant 0 : index
    %c0_77 = arith.constant 0 : index
    %132 = vector.load %arg5[%c6_75, %c0_76, %c0_77] : memref<8x8x256xf32, #tpu.memory_space<vmem>>, vector<1x8x256xf32>
    %133 = vector.shape_cast %132 : vector<1x8x256xf32> to vector<8x256xf32>
    %134 = arith.mulf %125, %131 : vector<8x256xf32>
    %135 = arith.mulf %129, %133 : vector<8x256xf32>
    %136 = arith.subf %134, %135 : vector<8x256xf32>
    %137 = arith.addf %117, %136 : vector<8x256xf32>
    %138 = arith.mulf %125, %133 : vector<8x256xf32>
    %139 = arith.mulf %129, %131 : vector<8x256xf32>
    %140 = arith.addf %138, %139 : vector<8x256xf32>
    %141 = arith.addf %121, %140 : vector<8x256xf32>
    %c0_78 = arith.constant 0 : index
    %c7 = arith.constant 7 : index
    %c0_79 = arith.constant 0 : index
    %142 = vector.load %arg2[%c0_78, %c7, %c0_79] : memref<2x8x256xf32, #tpu.memory_space<vmem>>, vector<1x1x256xf32>
    %143 = vector.shape_cast %142 : vector<1x1x256xf32> to vector<1x256xf32>
    %144 = vector.shape_cast %143 : vector<1x256xf32> to vector<1x256xf32>
    %145 = vector.broadcast %144 : vector<1x256xf32> to vector<8x256xf32>
    %c0_80 = arith.constant 0 : index
    %c7_81 = arith.constant 7 : index
    %c0_82 = arith.constant 0 : index
    %146 = vector.load %arg3[%c0_80, %c7_81, %c0_82] : memref<2x8x256xf32, #tpu.memory_space<vmem>>, vector<1x1x256xf32>
    %147 = vector.shape_cast %146 : vector<1x1x256xf32> to vector<1x256xf32>
    %148 = vector.shape_cast %147 : vector<1x256xf32> to vector<1x256xf32>
    %149 = vector.broadcast %148 : vector<1x256xf32> to vector<8x256xf32>
    %c7_83 = arith.constant 7 : index
    %c0_84 = arith.constant 0 : index
    %c0_85 = arith.constant 0 : index
    %150 = vector.load %arg4[%c7_83, %c0_84, %c0_85] : memref<8x8x256xf32, #tpu.memory_space<vmem>>, vector<1x8x256xf32>
    %151 = vector.shape_cast %150 : vector<1x8x256xf32> to vector<8x256xf32>
    %c7_86 = arith.constant 7 : index
    %c0_87 = arith.constant 0 : index
    %c0_88 = arith.constant 0 : index
    %152 = vector.load %arg5[%c7_86, %c0_87, %c0_88] : memref<8x8x256xf32, #tpu.memory_space<vmem>>, vector<1x8x256xf32>
    %153 = vector.shape_cast %152 : vector<1x8x256xf32> to vector<8x256xf32>
    %154 = arith.mulf %145, %151 : vector<8x256xf32>
    %155 = arith.mulf %149, %153 : vector<8x256xf32>
    %156 = arith.subf %154, %155 : vector<8x256xf32>
    %157 = arith.addf %137, %156 : vector<8x256xf32>
    %158 = arith.mulf %145, %153 : vector<8x256xf32>
    %159 = arith.mulf %149, %151 : vector<8x256xf32>
    %160 = arith.addf %158, %159 : vector<8x256xf32>
    %161 = arith.addf %141, %160 : vector<8x256xf32>
    %c0_89 = arith.constant 0 : index
    %c0_90 = arith.constant 0 : index
    %c0_91 = arith.constant 0 : index
    %162 = vector.load %arg6[%c0_89, %c0_90, %c0_91] : memref<2x8x256xf32, #tpu.memory_space<vmem>>, vector<1x8x256xf32>
    %163 = vector.shape_cast %162 : vector<1x8x256xf32> to vector<8x256xf32>
    %164 = vector.shape_cast %157 : vector<8x256xf32> to vector<1x8x256xf32>
    tpu.vector_store %arg6[%c0_89, %c0_90, %c0_91], %164 {strides = array<i32>} : memref<2x8x256xf32, #tpu.memory_space<vmem>>, vector<1x8x256xf32>,
    %c0_92 = arith.constant 0 : index
    %c0_93 = arith.constant 0 : index
    %c0_94 = arith.constant 0 : index
    %165 = vector.load %arg7[%c0_92, %c0_93, %c0_94] : memref<2x8x256xf32, #tpu.memory_space<vmem>>, vector<1x8x256xf32>
    %166 = vector.shape_cast %165 : vector<1x8x256xf32> to vector<8x256xf32>
    %167 = vector.shape_cast %161 : vector<8x256xf32> to vector<1x8x256xf32>
    tpu.vector_store %arg7[%c0_92, %c0_93, %c0_94], %167 {strides = array<i32>} : memref<2x8x256xf32, #tpu.memory_space<vmem>>, vector<1x8x256xf32>,
    %cst_95 = arith.constant 0.000000e+00 : f32
    %168 = vector.broadcast %cst_95 : f32 to vector<8x256xf32>
    %cst_96 = arith.constant 0.000000e+00 : f32
    %169 = vector.broadcast %cst_96 : f32 to vector<8x256xf32>
    %c1_97 = arith.constant 1 : index
    %c0_98 = arith.constant 0 : index
    %c0_99 = arith.constant 0 : index
    %170 = vector.load %arg2[%c1_97, %c0_98, %c0_99] : memref<2x8x256xf32, #tpu.memory_space<vmem>>, vector<1x1x256xf32>
    %171 = vector.shape_cast %170 : vector<1x1x256xf32> to vector<1x256xf32>
    %172 = vector.shape_cast %171 : vector<1x256xf32> to vector<1x256xf32>
    %173 = vector.broadcast %172 : vector<1x256xf32> to vector<8x256xf32>
    %c1_100 = arith.constant 1 : index
    %c0_101 = arith.constant 0 : index
    %c0_102 = arith.constant 0 : index
    %174 = vector.load %arg3[%c1_100, %c0_101, %c0_102] : memref<2x8x256xf32, #tpu.memory_space<vmem>>, vector<1x1x256xf32>
    %175 = vector.shape_cast %174 : vector<1x1x256xf32> to vector<1x256xf32>
    %176 = vector.shape_cast %175 : vector<1x256xf32> to vector<1x256xf32>
    %177 = vector.broadcast %176 : vector<1x256xf32> to vector<8x256xf32>
    %c0_103 = arith.constant 0 : index
    %c0_104 = arith.constant 0 : index
    %c0_105 = arith.constant 0 : index
    %178 = vector.load %arg4[%c0_103, %c0_104, %c0_105] : memref<8x8x256xf32, #tpu.memory_space<vmem>>, vector<1x8x256xf32>
    %179 = vector.shape_cast %178 : vector<1x8x256xf32> to vector<8x256xf32>
    %c0_106 = arith.constant 0 : index
    %c0_107 = arith.constant 0 : index
    %c0_108 = arith.constant 0 : index
    %180 = vector.load %arg5[%c0_106, %c0_107, %c0_108] : memref<8x8x256xf32, #tpu.memory_space<vmem>>, vector<1x8x256xf32>
    %181 = vector.shape_cast %180 : vector<1x8x256xf32> to vector<8x256xf32>
    %182 = arith.mulf %173, %179 : vector<8x256xf32>
    %183 = arith.mulf %177, %181 : vector<8x256xf32>
    %184 = arith.subf %182, %183 : vector<8x256xf32>
    %185 = arith.addf %168, %184 : vector<8x256xf32>
    %186 = arith.mulf %173, %181 : vector<8x256xf32>
    %187 = arith.mulf %177, %179 : vector<8x256xf32>
    %188 = arith.addf %186, %187 : vector<8x256xf32>
    %189 = arith.addf %169, %188 : vector<8x256xf32>
    %c1_109 = arith.constant 1 : index
    %c1_110 = arith.constant 1 : index
    %c0_111 = arith.constant 0 : index
    %190 = vector.load %arg2[%c1_109, %c1_110, %c0_111] : memref<2x8x256xf32, #tpu.memory_space<vmem>>, vector<1x1x256xf32>
    %191 = vector.shape_cast %190 : vector<1x1x256xf32> to vector<1x256xf32>
    %192 = vector.shape_cast %191 : vector<1x256xf32> to vector<1x256xf32>
    %193 = vector.broadcast %192 : vector<1x256xf32> to vector<8x256xf32>
    %c1_112 = arith.constant 1 : index
    %c1_113 = arith.constant 1 : index
    %c0_114 = arith.constant 0 : index
    %194 = vector.load %arg3[%c1_112, %c1_113, %c0_114] : memref<2x8x256xf32, #tpu.memory_space<vmem>>, vector<1x1x256xf32>
    %195 = vector.shape_cast %194 : vector<1x1x256xf32> to vector<1x256xf32>
    %196 = vector.shape_cast %195 : vector<1x256xf32> to vector<1x256xf32>
    %197 = vector.broadcast %196 : vector<1x256xf32> to vector<8x256xf32>
    %c1_115 = arith.constant 1 : index
    %c0_116 = arith.constant 0 : index
    %c0_117 = arith.constant 0 : index
    %198 = vector.load %arg4[%c1_115, %c0_116, %c0_117] : memref<8x8x256xf32, #tpu.memory_space<vmem>>, vector<1x8x256xf32>
    %199 = vector.shape_cast %198 : vector<1x8x256xf32> to vector<8x256xf32>
    %c1_118 = arith.constant 1 : index
    %c0_119 = arith.constant 0 : index
    %c0_120 = arith.constant 0 : index
    %200 = vector.load %arg5[%c1_118, %c0_119, %c0_120] : memref<8x8x256xf32, #tpu.memory_space<vmem>>, vector<1x8x256xf32>
    %201 = vector.shape_cast %200 : vector<1x8x256xf32> to vector<8x256xf32>
    %202 = arith.mulf %193, %199 : vector<8x256xf32>
    %203 = arith.mulf %197, %201 : vector<8x256xf32>
    %204 = arith.subf %202, %203 : vector<8x256xf32>
    %205 = arith.addf %185, %204 : vector<8x256xf32>
    %206 = arith.mulf %193, %201 : vector<8x256xf32>
    %207 = arith.mulf %197, %199 : vector<8x256xf32>
    %208 = arith.addf %206, %207 : vector<8x256xf32>
    %209 = arith.addf %189, %208 : vector<8x256xf32>
    %c1_121 = arith.constant 1 : index
    %c2_122 = arith.constant 2 : index
    %c0_123 = arith.constant 0 : index
    %210 = vector.load %arg2[%c1_121, %c2_122, %c0_123] : memref<2x8x256xf32, #tpu.memory_space<vmem>>, vector<1x1x256xf32>
    %211 = vector.shape_cast %210 : vector<1x1x256xf32> to vector<1x256xf32>
    %212 = vector.shape_cast %211 : vector<1x256xf32> to vector<1x256xf32>
    %213 = vector.broadcast %212 : vector<1x256xf32> to vector<8x256xf32>
    %c1_124 = arith.constant 1 : index
    %c2_125 = arith.constant 2 : index
    %c0_126 = arith.constant 0 : index
    %214 = vector.load %arg3[%c1_124, %c2_125, %c0_126] : memref<2x8x256xf32, #tpu.memory_space<vmem>>, vector<1x1x256xf32>
    %215 = vector.shape_cast %214 : vector<1x1x256xf32> to vector<1x256xf32>
    %216 = vector.shape_cast %215 : vector<1x256xf32> to vector<1x256xf32>
    %217 = vector.broadcast %216 : vector<1x256xf32> to vector<8x256xf32>
    %c2_127 = arith.constant 2 : index
    %c0_128 = arith.constant 0 : index
    %c0_129 = arith.constant 0 : index
    %218 = vector.load %arg4[%c2_127, %c0_128, %c0_129] : memref<8x8x256xf32, #tpu.memory_space<vmem>>, vector<1x8x256xf32>
    %219 = vector.shape_cast %218 : vector<1x8x256xf32> to vector<8x256xf32>
    %c2_130 = arith.constant 2 : index
    %c0_131 = arith.constant 0 : index
    %c0_132 = arith.constant 0 : index
    %220 = vector.load %arg5[%c2_130, %c0_131, %c0_132] : memref<8x8x256xf32, #tpu.memory_space<vmem>>, vector<1x8x256xf32>
    %221 = vector.shape_cast %220 : vector<1x8x256xf32> to vector<8x256xf32>
    %222 = arith.mulf %213, %219 : vector<8x256xf32>
    %223 = arith.mulf %217, %221 : vector<8x256xf32>
    %224 = arith.subf %222, %223 : vector<8x256xf32>
    %225 = arith.addf %205, %224 : vector<8x256xf32>
    %226 = arith.mulf %213, %221 : vector<8x256xf32>
    %227 = arith.mulf %217, %219 : vector<8x256xf32>
    %228 = arith.addf %226, %227 : vector<8x256xf32>
    %229 = arith.addf %209, %228 : vector<8x256xf32>
    %c1_133 = arith.constant 1 : index
    %c3_134 = arith.constant 3 : index
    %c0_135 = arith.constant 0 : index
    %230 = vector.load %arg2[%c1_133, %c3_134, %c0_135] : memref<2x8x256xf32, #tpu.memory_space<vmem>>, vector<1x1x256xf32>
    %231 = vector.shape_cast %230 : vector<1x1x256xf32> to vector<1x256xf32>
    %232 = vector.shape_cast %231 : vector<1x256xf32> to vector<1x256xf32>
    %233 = vector.broadcast %232 : vector<1x256xf32> to vector<8x256xf32>
    %c1_136 = arith.constant 1 : index
    %c3_137 = arith.constant 3 : index
    %c0_138 = arith.constant 0 : index
    %234 = vector.load %arg3[%c1_136, %c3_137, %c0_138] : memref<2x8x256xf32, #tpu.memory_space<vmem>>, vector<1x1x256xf32>
    %235 = vector.shape_cast %234 : vector<1x1x256xf32> to vector<1x256xf32>
    %236 = vector.shape_cast %235 : vector<1x256xf32> to vector<1x256xf32>
    %237 = vector.broadcast %236 : vector<1x256xf32> to vector<8x256xf32>
    %c3_139 = arith.constant 3 : index
    %c0_140 = arith.constant 0 : index
    %c0_141 = arith.constant 0 : index
    %238 = vector.load %arg4[%c3_139, %c0_140, %c0_141] : memref<8x8x256xf32, #tpu.memory_space<vmem>>, vector<1x8x256xf32>
    %239 = vector.shape_cast %238 : vector<1x8x256xf32> to vector<8x256xf32>
    %c3_142 = arith.constant 3 : index
    %c0_143 = arith.constant 0 : index
    %c0_144 = arith.constant 0 : index
    %240 = vector.load %arg5[%c3_142, %c0_143, %c0_144] : memref<8x8x256xf32, #tpu.memory_space<vmem>>, vector<1x8x256xf32>
    %241 = vector.shape_cast %240 : vector<1x8x256xf32> to vector<8x256xf32>
    %242 = arith.mulf %233, %239 : vector<8x256xf32>
    %243 = arith.mulf %237, %241 : vector<8x256xf32>
    %244 = arith.subf %242, %243 : vector<8x256xf32>
    %245 = arith.addf %225, %244 : vector<8x256xf32>
    %246 = arith.mulf %233, %241 : vector<8x256xf32>
    %247 = arith.mulf %237, %239 : vector<8x256xf32>
    %248 = arith.addf %246, %247 : vector<8x256xf32>
    %249 = arith.addf %229, %248 : vector<8x256xf32>
    %c1_145 = arith.constant 1 : index
    %c4_146 = arith.constant 4 : index
    %c0_147 = arith.constant 0 : index
    %250 = vector.load %arg2[%c1_145, %c4_146, %c0_147] : memref<2x8x256xf32, #tpu.memory_space<vmem>>, vector<1x1x256xf32>
    %251 = vector.shape_cast %250 : vector<1x1x256xf32> to vector<1x256xf32>
    %252 = vector.shape_cast %251 : vector<1x256xf32> to vector<1x256xf32>
    %253 = vector.broadcast %252 : vector<1x256xf32> to vector<8x256xf32>
    %c1_148 = arith.constant 1 : index
    %c4_149 = arith.constant 4 : index
    %c0_150 = arith.constant 0 : index
    %254 = vector.load %arg3[%c1_148, %c4_149, %c0_150] : memref<2x8x256xf32, #tpu.memory_space<vmem>>, vector<1x1x256xf32>
    %255 = vector.shape_cast %254 : vector<1x1x256xf32> to vector<1x256xf32>
    %256 = vector.shape_cast %255 : vector<1x256xf32> to vector<1x256xf32>
    %257 = vector.broadcast %256 : vector<1x256xf32> to vector<8x256xf32>
    %c4_151 = arith.constant 4 : index
    %c0_152 = arith.constant 0 : index
    %c0_153 = arith.constant 0 : index
    %258 = vector.load %arg4[%c4_151, %c0_152, %c0_153] : memref<8x8x256xf32, #tpu.memory_space<vmem>>, vector<1x8x256xf32>
    %259 = vector.shape_cast %258 : vector<1x8x256xf32> to vector<8x256xf32>
    %c4_154 = arith.constant 4 : index
    %c0_155 = arith.constant 0 : index
    %c0_156 = arith.constant 0 : index
    %260 = vector.load %arg5[%c4_154, %c0_155, %c0_156] : memref<8x8x256xf32, #tpu.memory_space<vmem>>, vector<1x8x256xf32>
    %261 = vector.shape_cast %260 : vector<1x8x256xf32> to vector<8x256xf32>
    %262 = arith.mulf %253, %259 : vector<8x256xf32>
    %263 = arith.mulf %257, %261 : vector<8x256xf32>
    %264 = arith.subf %262, %263 : vector<8x256xf32>
    %265 = arith.addf %245, %264 : vector<8x256xf32>
    %266 = arith.mulf %253, %261 : vector<8x256xf32>
    %267 = arith.mulf %257, %259 : vector<8x256xf32>
    %268 = arith.addf %266, %267 : vector<8x256xf32>
    %269 = arith.addf %249, %268 : vector<8x256xf32>
    %c1_157 = arith.constant 1 : index
    %c5_158 = arith.constant 5 : index
    %c0_159 = arith.constant 0 : index
    %270 = vector.load %arg2[%c1_157, %c5_158, %c0_159] : memref<2x8x256xf32, #tpu.memory_space<vmem>>, vector<1x1x256xf32>
    %271 = vector.shape_cast %270 : vector<1x1x256xf32> to vector<1x256xf32>
    %272 = vector.shape_cast %271 : vector<1x256xf32> to vector<1x256xf32>
    %273 = vector.broadcast %272 : vector<1x256xf32> to vector<8x256xf32>
    %c1_160 = arith.constant 1 : index
    %c5_161 = arith.constant 5 : index
    %c0_162 = arith.constant 0 : index
    %274 = vector.load %arg3[%c1_160, %c5_161, %c0_162] : memref<2x8x256xf32, #tpu.memory_space<vmem>>, vector<1x1x256xf32>
    %275 = vector.shape_cast %274 : vector<1x1x256xf32> to vector<1x256xf32>
    %276 = vector.shape_cast %275 : vector<1x256xf32> to vector<1x256xf32>
    %277 = vector.broadcast %276 : vector<1x256xf32> to vector<8x256xf32>
    %c5_163 = arith.constant 5 : index
    %c0_164 = arith.constant 0 : index
    %c0_165 = arith.constant 0 : index
    %278 = vector.load %arg4[%c5_163, %c0_164, %c0_165] : memref<8x8x256xf32, #tpu.memory_space<vmem>>, vector<1x8x256xf32>
    %279 = vector.shape_cast %278 : vector<1x8x256xf32> to vector<8x256xf32>
    %c5_166 = arith.constant 5 : index
    %c0_167 = arith.constant 0 : index
    %c0_168 = arith.constant 0 : index
    %280 = vector.load %arg5[%c5_166, %c0_167, %c0_168] : memref<8x8x256xf32, #tpu.memory_space<vmem>>, vector<1x8x256xf32>
    %281 = vector.shape_cast %280 : vector<1x8x256xf32> to vector<8x256xf32>
    %282 = arith.mulf %273, %279 : vector<8x256xf32>
    %283 = arith.mulf %277, %281 : vector<8x256xf32>
    %284 = arith.subf %282, %283 : vector<8x256xf32>
    %285 = arith.addf %265, %284 : vector<8x256xf32>
    %286 = arith.mulf %273, %281 : vector<8x256xf32>
    %287 = arith.mulf %277, %279 : vector<8x256xf32>
    %288 = arith.addf %286, %287 : vector<8x256xf32>
    %289 = arith.addf %269, %288 : vector<8x256xf32>
    %c1_169 = arith.constant 1 : index
    %c6_170 = arith.constant 6 : index
    %c0_171 = arith.constant 0 : index
    %290 = vector.load %arg2[%c1_169, %c6_170, %c0_171] : memref<2x8x256xf32, #tpu.memory_space<vmem>>, vector<1x1x256xf32>
    %291 = vector.shape_cast %290 : vector<1x1x256xf32> to vector<1x256xf32>
    %292 = vector.shape_cast %291 : vector<1x256xf32> to vector<1x256xf32>
    %293 = vector.broadcast %292 : vector<1x256xf32> to vector<8x256xf32>
    %c1_172 = arith.constant 1 : index
    %c6_173 = arith.constant 6 : index
    %c0_174 = arith.constant 0 : index
    %294 = vector.load %arg3[%c1_172, %c6_173, %c0_174] : memref<2x8x256xf32, #tpu.memory_space<vmem>>, vector<1x1x256xf32>
    %295 = vector.shape_cast %294 : vector<1x1x256xf32> to vector<1x256xf32>
    %296 = vector.shape_cast %295 : vector<1x256xf32> to vector<1x256xf32>
    %297 = vector.broadcast %296 : vector<1x256xf32> to vector<8x256xf32>
    %c6_175 = arith.constant 6 : index
    %c0_176 = arith.constant 0 : index
    %c0_177 = arith.constant 0 : index
    %298 = vector.load %arg4[%c6_175, %c0_176, %c0_177] : memref<8x8x256xf32, #tpu.memory_space<vmem>>, vector<1x8x256xf32>
    %299 = vector.shape_cast %298 : vector<1x8x256xf32> to vector<8x256xf32>
    %c6_178 = arith.constant 6 : index
    %c0_179 = arith.constant 0 : index
    %c0_180 = arith.constant 0 : index
    %300 = vector.load %arg5[%c6_178, %c0_179, %c0_180] : memref<8x8x256xf32, #tpu.memory_space<vmem>>, vector<1x8x256xf32>
    %301 = vector.shape_cast %300 : vector<1x8x256xf32> to vector<8x256xf32>
    %302 = arith.mulf %293, %299 : vector<8x256xf32>
    %303 = arith.mulf %297, %301 : vector<8x256xf32>
    %304 = arith.subf %302, %303 : vector<8x256xf32>
    %305 = arith.addf %285, %304 : vector<8x256xf32>
    %306 = arith.mulf %293, %301 : vector<8x256xf32>
    %307 = arith.mulf %297, %299 : vector<8x256xf32>
    %308 = arith.addf %306, %307 : vector<8x256xf32>
    %309 = arith.addf %289, %308 : vector<8x256xf32>
    %c1_181 = arith.constant 1 : index
    %c7_182 = arith.constant 7 : index
    %c0_183 = arith.constant 0 : index
    %310 = vector.load %arg2[%c1_181, %c7_182, %c0_183] : memref<2x8x256xf32, #tpu.memory_space<vmem>>, vector<1x1x256xf32>
    %311 = vector.shape_cast %310 : vector<1x1x256xf32> to vector<1x256xf32>
    %312 = vector.shape_cast %311 : vector<1x256xf32> to vector<1x256xf32>
    %313 = vector.broadcast %312 : vector<1x256xf32> to vector<8x256xf32>
    %c1_184 = arith.constant 1 : index
    %c7_185 = arith.constant 7 : index
    %c0_186 = arith.constant 0 : index
    %314 = vector.load %arg3[%c1_184, %c7_185, %c0_186] : memref<2x8x256xf32, #tpu.memory_space<vmem>>, vector<1x1x256xf32>
    %315 = vector.shape_cast %314 : vector<1x1x256xf32> to vector<1x256xf32>
    %316 = vector.shape_cast %315 : vector<1x256xf32> to vector<1x256xf32>
    %317 = vector.broadcast %316 : vector<1x256xf32> to vector<8x256xf32>
    %c7_187 = arith.constant 7 : index
    %c0_188 = arith.constant 0 : index
    %c0_189 = arith.constant 0 : index
    %318 = vector.load %arg4[%c7_187, %c0_188, %c0_189] : memref<8x8x256xf32, #tpu.memory_space<vmem>>, vector<1x8x256xf32>
    %319 = vector.shape_cast %318 : vector<1x8x256xf32> to vector<8x256xf32>
    %c7_190 = arith.constant 7 : index
    %c0_191 = arith.constant 0 : index
    %c0_192 = arith.constant 0 : index
    %320 = vector.load %arg5[%c7_190, %c0_191, %c0_192] : memref<8x8x256xf32, #tpu.memory_space<vmem>>, vector<1x8x256xf32>
    %321 = vector.shape_cast %320 : vector<1x8x256xf32> to vector<8x256xf32>
    %322 = arith.mulf %313, %319 : vector<8x256xf32>
    %323 = arith.mulf %317, %321 : vector<8x256xf32>
    %324 = arith.subf %322, %323 : vector<8x256xf32>
    %325 = arith.addf %305, %324 : vector<8x256xf32>
    %326 = arith.mulf %313, %321 : vector<8x256xf32>
    %327 = arith.mulf %317, %319 : vector<8x256xf32>
    %328 = arith.addf %326, %327 : vector<8x256xf32>
    %329 = arith.addf %309, %328 : vector<8x256xf32>
    %c1_193 = arith.constant 1 : index
    %c0_194 = arith.constant 0 : index
    %c0_195 = arith.constant 0 : index
    %330 = vector.load %arg6[%c1_193, %c0_194, %c0_195] : memref<2x8x256xf32, #tpu.memory_space<vmem>>, vector<1x8x256xf32>
    %331 = vector.shape_cast %330 : vector<1x8x256xf32> to vector<8x256xf32>
    %332 = vector.shape_cast %325 : vector<8x256xf32> to vector<1x8x256xf32>
    tpu.vector_store %arg6[%c1_193, %c0_194, %c0_195], %332 {strides = array<i32>} : memref<2x8x256xf32, #tpu.memory_space<vmem>>, vector<1x8x256xf32>,
    %c1_196 = arith.constant 1 : index
    %c0_197 = arith.constant 0 : index
    %c0_198 = arith.constant 0 : index
    %333 = vector.load %arg7[%c1_196, %c0_197, %c0_198] : memref<2x8x256xf32, #tpu.memory_space<vmem>>, vector<1x8x256xf32>
    %334 = vector.shape_cast %333 : vector<1x8x256xf32> to vector<8x256xf32>
    %335 = vector.shape_cast %329 : vector<8x256xf32> to vector<1x8x256xf32>
    tpu.vector_store %arg7[%c1_196, %c0_197, %c0_198], %335 {strides = array<i32>} : memref<2x8x256xf32, #tpu.memory_space<vmem>>, vector<1x8x256xf32>,
    return
  }
  func.func @transform_0(%arg0: i32, %arg1: i32) -> (i32, i32, i32) {
    %c0_i32 = arith.constant 0 : i32
    %c0_i32_0 = arith.constant 0 : i32
    return %c0_i32, %arg1, %arg0 : i32, i32, i32
  }
  func.func @transform_1(%arg0: i32, %arg1: i32) -> (i32, i32, i32) {
    %c0_i32 = arith.constant 0 : i32
    %c0_i32_0 = arith.constant 0 : i32
    return %c0_i32, %arg1, %arg0 : i32, i32, i32
  }
  func.func @transform_2(%arg0: i32, %arg1: i32) -> (i32, i32, i32) {
    %c0_i32 = arith.constant 0 : i32
    %c0_i32_0 = arith.constant 0 : i32
    return %arg1, %c0_i32, %arg0 : i32, i32, i32
  }
  func.func @transform_3(%arg0: i32, %arg1: i32) -> (i32, i32, i32) {
    %c0_i32 = arith.constant 0 : i32
    %c0_i32_0 = arith.constant 0 : i32
    return %arg1, %c0_i32, %arg0 : i32, i32, i32
  }
  func.func @transform_4(%arg0: i32, %arg1: i32) -> (i32, i32, i32) {
    %c0_i32 = arith.constant 0 : i32
    %c0_i32_0 = arith.constant 0 : i32
    %c0_i32_1 = arith.constant 0 : i32
    return %c0_i32, %c0_i32_0, %arg0 : i32, i32, i32
  }
  func.func @transform_5(%arg0: i32, %arg1: i32) -> (i32, i32, i32) {
    %c0_i32 = arith.constant 0 : i32
    %c0_i32_0 = arith.constant 0 : i32
    %c0_i32_1 = arith.constant 0 : i32
    return %c0_i32, %c0_i32_0, %arg0 : i32, i32, i32
  }
}

</mosaic_0001>

<llo_original>
// kernel: spectral_conv3d.1
$region0: #{spectral_conv3d.1}
  #allocation0 [shape = 'u32[]', space=smem, size = 0x4, offset = 0x4, fixed_abs, tag = 'smem constant byte address 0x4 - core index']
  #allocation1 [shape = 'u32[72,128]{1,0:T(1,128)}', space=vmem, size = 0x9000, scoped, tag = 'internal scratch']
  %s0 = inlined_call_operand.vmem [shape: f32[2,8,512], index: 0, kind: input, shape index: {}]
  %s1 = inlined_call_operand.vmem [shape: f32[2,8,512], index: 1, kind: input, shape index: {}]
  %s2 = inlined_call_operand.vmem [shape: f32[8,8,512], index: 2, kind: input, shape index: {}]
  %s3 = inlined_call_operand.vmem [shape: f32[8,8,512], index: 3, kind: input, shape index: {}]
  %s4 = inlined_call_operand.vmem [shape: f32[2,8,512], index: 4, kind: output, shape index: {0}]
  %s5 = inlined_call_operand.vmem [shape: f32[2,8,512], index: 5, kind: output, shape index: {1}]
  %6 = xla_tuple %s4, %s5
  %s7 = sld [smem:[#allocation0]]
  $region187: #{spectral_conv3d.1} parent=0
    _
  %s9 = ssub.s32 1, %s7
  %s10 = scalar_select 0, %s9, %s7
  $region1: #{spectral_conv3d.1} parent=0
    #allocation2 [shape = 'u8[32768]{0}', space=vmem, size = 0x8000, scoped, tag = 'input window, operand 0']
    #allocation3 [shape = 'u8[32768]{0}', space=vmem, size = 0x8000, scoped, tag = 'input window, operand 1']
    #allocation4 [shape = 'u8[131072]{0}', space=vmem, size = 0x20000, scoped, tag = 'input window, operand 2']
    #allocation5 [shape = 'u8[131072]{0}', space=vmem, size = 0x20000, scoped, tag = 'input window, operand 3']
    #allocation6 [shape = 'u8[32768]{0}', space=vmem, size = 0x8000, scoped, tag = 'output window, operand 0']
    #allocation7 [shape = 'u8[32768]{0}', space=vmem, size = 0x8000, scoped, tag = 'output window, operand 1']
    loop: start=0, step=1, limit=4
    $region2: #{spectral_conv3d.1} parent=1 // loop_pre_header
      _
    $region3: #{spectral_conv3d.1} parent=1 // loop_header
      %s12 = sphi 0, %s16
      %p13 = scmp.ge.s32.totalorder %s12, 4
      %s19 = sphi 0, %s31
      %s20 = sphi 0, %s27
      %s21 = sphi 0, %s19
      %s22 = sphi 0, %s20
      %s23 = sphi 0, %s21
      %s24 = sphi 0, %s22
      %s36 = sphi 0, %s38
      %s39 = sphi 0, %s36
      %s40 = sphi 0, %s39
      %s56 = sphi 0, %s40
      %s64 = sphi 0, %s66
      %s67 = sphi 0, %s64
      %s68 = sphi 0, %s67
      %s84 = sphi 0, %s68
      %s92 = sphi 0, %s94
      %s95 = sphi 0, %s92
      %s96 = sphi 0, %s95
      %s112 = sphi 0, %s96
      %s120 = sphi 0, %s122
      %s123 = sphi 0, %s120
      %s124 = sphi 0, %s123
      %s140 = sphi 0, %s124
      %s146 = sphi 0, %s148
      %s149 = sphi 0, %s146
      %s150 = sphi 0, %s149
      %s166 = sphi 0, %s150
      %s172 = sphi 0, %s174
      %s175 = sphi 0, %s172
      %s176 = sphi 0, %s175
      %s192 = sphi 0, %s176
    $region4: #{spectral_conv3d.1} parent=1 // loop_header_branch
      %15 = sbr.rel (%p13) target = $region8
    $region5: #{spectral_conv3d.1} parent=1 // loop_body
      %s17 = ssub.s32 %s12, 1
      %s18 = ssub.s32 %s12, 2
      %s25 = sadd.s32 1, %s20
      %p26 = scmp.ge.s32.totalorder %s25, 1
      %s27 = scalar_select %p26, 0, %s25
      %s28 = sadd.s32 1, %s19
      %s29 = scalar_select %p26, %s28, %s19
      %p30 = scmp.ge.s32.totalorder %s29, 2
      %s31 = scalar_select %p30, 0, %s29
      %s32 = ssub.s32 %s20, %s27
      %s33 = ssub.s32 %s19, %s31
      %s34 = sor.u32 %s32, %s33
      %p35 = scmp.eq.s32.totalorder %s34, 0
      %s37 = sadd.s32 %s36, 1
      %s38 = scalar_select %p35, %s36, %s37
      %p41 = pneg %p35
      %p42 = scmp.eq.s32.totalorder %s12, 1
      %p43 = por %p41, %p42
      %p44 = scmp.ne.s32.totalorder %s36, %s39
      %p45 = scmp.eq.s32.totalorder %s12, 0
      %p46 = por %p44, %p45
      %p47 = scmp.ne.s32.totalorder %s36, %s39
      %p48 = scmp.eq.s32.totalorder %s17, 1
      %p49 = por %p47, %p48
      %p50 = scmp.ne.s32.totalorder %s39, %s40
      %p51 = scmp.eq.s32.totalorder %s17, 0
      %p52 = por %p50, %p51
      %p53 = scmp.ne.s32.totalorder %s39, %s40
      %p54 = scmp.eq.s32.totalorder %s18, 1
      %p55 = por %p53, %p54
      %p57 = scmp.ne.s32.totalorder %s40, %s56
      %p58 = scmp.eq.s32.totalorder %s18, 0
      %p59 = por %p57, %p58
      %s60 = ssub.s32 %s20, %s27
      %s61 = ssub.s32 %s19, %s31
      %s62 = sor.u32 %s60, %s61
      %p63 = scmp.eq.s32.totalorder %s62, 0
      %s65 = sadd.s32 %s64, 1
      %s66 = scalar_select %p63, %s64, %s65
      %p69 = pneg %p63
      %p70 = scmp.eq.s32.totalorder %s12, 1
      %p71 = por %p69, %p70
      %p72 = scmp.ne.s32.totalorder %s64, %s67
      %p73 = scmp.eq.s32.totalorder %s12, 0
      %p74 = por %p72, %p73
      %p75 = scmp.ne.s32.totalorder %s64, %s67
      %p76 = scmp.eq.s32.totalorder %s17, 1
      %p77 = por %p75, %p76
      %p78 = scmp.ne.s32.totalorder %s67, %s68
      %p79 = scmp.eq.s32.totalorder %s17, 0
      %p80 = por %p78, %p79
      %p81 = scmp.ne.s32.totalorder %s67, %s68
      %p82 = scmp.eq.s32.totalorder %s18, 1
      %p83 = por %p81, %p82
      %p85 = scmp.ne.s32.totalorder %s68, %s84
      %p86 = scmp.eq.s32.totalorder %s18, 0
      %p87 = por %p85, %p86
      %s88 = ssub.s32 %s20, %s27
      %s89 = ssub.s32 %s19, %s31
      %s90 = sor.u32 %s88, %s89
      %p91 = scmp.eq.s32.totalorder %s90, 0
      %s93 = sadd.s32 %s92, 1
      %s94 = scalar_select %p91, %s92, %s93
      %p97 = pneg %p91
      %p98 = scmp.eq.s32.totalorder %s12, 1
      %p99 = por %p97, %p98
      %p100 = scmp.ne.s32.totalorder %s92, %s95
      %p101 = scmp.eq.s32.totalorder %s12, 0
      %p102 = por %p100, %p101
      %p103 = scmp.ne.s32.totalorder %s92, %s95
      %p104 = scmp.eq.s32.totalorder %s17, 1
      %p105 = por %p103, %p104
      %p106 = scmp.ne.s32.totalorder %s95, %s96
      %p107 = scmp.eq.s32.totalorder %s17, 0
      %p108 = por %p106, %p107
      %p109 = scmp.ne.s32.totalorder %s95, %s96
      %p110 = scmp.eq.s32.totalorder %s18, 1
      %p111 = por %p109, %p110
      %p113 = scmp.ne.s32.totalorder %s96, %s112
      %p114 = scmp.eq.s32.totalorder %s18, 0
      %p115 = por %p113, %p114
      %s116 = ssub.s32 %s20, %s27
      %s117 = ssub.s32 %s19, %s31
      %s118 = sor.u32 %s116, %s117
      %p119 = scmp.eq.s32.totalorder %s118, 0
      %s121 = sadd.s32 %s120, 1
      %s122 = scalar_select %p119, %s120, %s121
      %p125 = pneg %p119
      %p126 = scmp.eq.s32.totalorder %s12, 1
      %p127 = por %p125, %p126
      %p128 = scmp.ne.s32.totalorder %s120, %s123
      %p129 = scmp.eq.s32.totalorder %s12, 0
      %p130 = por %p128, %p129
      %p131 = scmp.ne.s32.totalorder %s120, %s123
      %p132 = scmp.eq.s32.totalorder %s17, 1
      %p133 = por %p131, %p132
      %p134 = scmp.ne.s32.totalorder %s123, %s124
      %p135 = scmp.eq.s32.totalorder %s17, 0
      %p136 = por %p134, %p135
      %p137 = scmp.ne.s32.totalorder %s123, %s124
      %p138 = scmp.eq.s32.totalorder %s18, 1
      %p139 = por %p137, %p138
      %p141 = scmp.ne.s32.totalorder %s124, %s140
      %p142 = scmp.eq.s32.totalorder %s18, 0
      %p143 = por %p141, %p142
      %s144 = ssub.s32 %s19, %s31
      %p145 = scmp.eq.s32.totalorder %s144, 0
      %s147 = sadd.s32 %s146, 1
      %s148 = scalar_select %p145, %s146, %s147
      %p151 = pneg %p145
      %p152 = scmp.eq.s32.totalorder %s12, 1
      %p153 = por %p151, %p152
      %p154 = scmp.ne.s32.totalorder %s146, %s149
      %p155 = scmp.eq.s32.totalorder %s12, 0
      %p156 = por %p154, %p155
      %p157 = scmp.ne.s32.totalorder %s146, %s149
      %p158 = scmp.eq.s32.totalorder %s17, 1
      %p159 = por %p157, %p158
      %p160 = scmp.ne.s32.totalorder %s149, %s150
      %p161 = scmp.eq.s32.totalorder %s17, 0
      %p162 = por %p160, %p161
      %p163 = scmp.ne.s32.totalorder %s149, %s150
      %p164 = scmp.eq.s32.totalorder %s18, 1
      %p165 = por %p163, %p164
      %p167 = scmp.ne.s32.totalorder %s150, %s166
      %p168 = scmp.eq.s32.totalorder %s18, 0
      %p169 = por %p167, %p168
      %s170 = ssub.s32 %s19, %s31
      %p171 = scmp.eq.s32.totalorder %s170, 0
      %s173 = sadd.s32 %s172, 1
      %s174 = scalar_select %p171, %s172, %s173
      %p177 = pneg %p171
      %p178 = scmp.eq.s32.totalorder %s12, 1
      %p179 = por %p177, %p178
      %p180 = scmp.ne.s32.totalorder %s172, %s175
      %p181 = scmp.eq.s32.totalorder %s12, 0
      %p182 = por %p180, %p181
      %p183 = scmp.ne.s32.totalorder %s172, %s175
      %p184 = scmp.eq.s32.totalorder %s17, 1
      %p185 = por %p183, %p184
      %p186 = scmp.ne.s32.totalorder %s175, %s176
      %p187 = scmp.eq.s32.totalorder %s17, 0
      %p188 = por %p186, %p187
      %p189 = scmp.ne.s32.totalorder %s175, %s176
      %p190 = scmp.eq.s32.totalorder %s18, 1
      %p191 = por %p189, %p190
      %p193 = scmp.ne.s32.totalorder %s176, %s192
      %p194 = scmp.eq.s32.totalorder %s18, 0
      %p195 = por %p193, %p194
      %p196 = scmp.le.s32.totalorder 1, %s12
      %p197 = scmp.lt.s32.totalorder %s12, 3
      %p198 = pnand %p196, %p197
      %p199 = pneg %p198
      // Predicated region
      $region9: #{spectral_conv3d.1} parent=5 // pred_check
        _
      $region10: #{spectral_conv3d.1} parent=5 // pred_check_branch
        %201 = sbr.rel (%p198) target = $region12
      $region11: #{spectral_conv3d.1} parent=5 // pred_region
        %s202 = ssub.s32 %s12, 1
      $region12: #{spectral_conv3d.1} parent=5 // pred_fallthru
        _
      %p203 = scmp.lt.s32.totalorder %s12, 2
      // Predicated region
      $region13: #{spectral_conv3d.1} parent=5 // pred_check
        %p204 = pneg %p203
      $region14: #{spectral_conv3d.1} parent=5 // pred_check_branch
        %206 = sbr.rel (%p204) target = $region16
      $region15: #{spectral_conv3d.1} parent=5 // pred_region
        // Predicated region
        $region17: #{spectral_conv3d.1} parent=15 // pred_check
          %p207 = pneg %p46
        $region18: #{spectral_conv3d.1} parent=15 // pred_check_branch
          %209 = sbr.rel (%p207) target = $region20
        $region19: #{spectral_conv3d.1} parent=15 // pred_region
          %s210 = sand.u32 %s36, 1
          %s211 = sand.u32 %s36, 1
          %s212 = smul.addr %s211, 32
          %s213 = scalar_lea.vmem [#allocation2], %s212
          %s214 = smul.u32 2, %s19
          %s215 = smul.addr %s20, 4
          %s216 = sadd.s32 %s214, %s215
          %s217 = smul.addr %s216, 8
          %s218 = scalar_lea.vmem %s0, %s217
          // Predicated region
          $region21: #{spectral_conv3d.1} parent=19 // pred_check
            _
          $region22: #{spectral_conv3d.1} parent=19 // pred_check_branch
            %220 = sbr.rel (0) target = $region24
          $region23: #{spectral_conv3d.1} parent=19 // pred_region
            // Predicated region
            $region25: #{spectral_conv3d.1} parent=23 // pred_check
              _
            $region26: #{spectral_conv3d.1} parent=23 // pred_check_branch
              %222 = sbr.rel (0) target = $region28
            $region27: #{spectral_conv3d.1} parent=23 // pred_region
              loop: start=0, step=1, limit=1
              $region29: #{spectral_conv3d.1} parent=27 // loop_pre_header
                _
              $region30: #{spectral_conv3d.1} parent=27 // loop_header
                %s224 = sphi 0, %s228
                %p225 = scmp.ge.s32.totalorder %s224, 1
                %s229 = sphi %s218, %s218
                %s230 = sphi %s213, %s213
              $region31: #{spectral_conv3d.1} parent=27 // loop_header_branch
                %227 = sbr.rel (%p225) target = $region35
              $region32: #{spectral_conv3d.1} parent=27 // loop_body
                %v231 = vld [vmem:[%s229] sm:$0xff]
                %232 = vst [vmem:[%s230] sm:$0xff] %v231
                %v233 = vld [vmem:[%s229 + $0x8] sm:$0xff]
                %234 = vst [vmem:[%s230 + $0x8] sm:$0xff] %v233
                %v235 = vld [vmem:[%s229 + $0x20] sm:$0xff]
                %236 = vst [vmem:[%s230 + $0x10] sm:$0xff] %v235
                %v237 = vld [vmem:[%s229 + $0x28] sm:$0xff]
                %238 = vst [vmem:[%s230 + $0x18] sm:$0xff] %v237
              $region33: #{spectral_conv3d.1} parent=27 // loop_footer
                %s228 = sadd.s32 1, %s224
              $region34: #{spectral_conv3d.1} parent=27 // loop_footer_branch
                %223 = sbr.rel target = $region30
              $region35: #{spectral_conv3d.1} parent=27 // loop_exit
                _
            $region28: #{spectral_conv3d.1} parent=23 // pred_fallthru
              _
            // Predicated region
            $region36: #{spectral_conv3d.1} parent=23 // pred_check
              _
            $region37: #{spectral_conv3d.1} parent=23 // pred_check_branch
              %240 = sbr.rel target = $region39
            $region38: #{spectral_conv3d.1} parent=23 // pred_region
              _
            $region39: #{spectral_conv3d.1} parent=23 // pred_fallthru
              _
          $region24: #{spectral_conv3d.1} parent=19 // pred_fallthru
            _
          %241 = vnop
        $region20: #{spectral_conv3d.1} parent=15 // pred_fallthru
          _
        // Predicated region
        $region40: #{spectral_conv3d.1} parent=15 // pred_check
          %p242 = pneg %p74
        $region41: #{spectral_conv3d.1} parent=15 // pred_check_branch
          %244 = sbr.rel (%p242) target = $region43
        $region42: #{spectral_conv3d.1} parent=15 // pred_region
          %s245 = sand.u32 %s64, 1
          %s246 = sand.u32 %s64, 1
          %s247 = smul.addr %s246, 32
          %s248 = scalar_lea.vmem [#allocation3], %s247
          %s249 = smul.u32 2, %s19
          %s250 = smul.addr %s20, 4
          %s251 = sadd.s32 %s249, %s250
          %s252 = smul.addr %s251, 8
          %s253 = scalar_lea.vmem %s1, %s252
          // Predicated region
          $region44: #{spectral_conv3d.1} parent=42 // pred_check
            _
          $region45: #{spectral_conv3d.1} parent=42 // pred_check_branch
            %255 = sbr.rel (0) target = $region47
          $region46: #{spectral_conv3d.1} parent=42 // pred_region
            // Predicated region
            $region48: #{spectral_conv3d.1} parent=46 // pred_check
              _
            $region49: #{spectral_conv3d.1} parent=46 // pred_check_branch
              %257 = sbr.rel (0) target = $region51
            $region50: #{spectral_conv3d.1} parent=46 // pred_region
              loop: start=0, step=1, limit=1
              $region52: #{spectral_conv3d.1} parent=50 // loop_pre_header
                _
              $region53: #{spectral_conv3d.1} parent=50 // loop_header
                %s259 = sphi 0, %s263
                %p260 = scmp.ge.s32.totalorder %s259, 1
                %s264 = sphi %s253, %s253
                %s265 = sphi %s248, %s248
              $region54: #{spectral_conv3d.1} parent=50 // loop_header_branch
                %262 = sbr.rel (%p260) target = $region58
              $region55: #{spectral_conv3d.1} parent=50 // loop_body
                %v266 = vld [vmem:[%s264] sm:$0xff]
                %267 = vst [vmem:[%s265] sm:$0xff] %v266
                %v268 = vld [vmem:[%s264 + $0x8] sm:$0xff]
                %269 = vst [vmem:[%s265 + $0x8] sm:$0xff] %v268
                %v270 = vld [vmem:[%s264 + $0x20] sm:$0xff]
                %271 = vst [vmem:[%s265 + $0x10] sm:$0xff] %v270
                %v272 = vld [vmem:[%s264 + $0x28] sm:$0xff]
                %273 = vst [vmem:[%s265 + $0x18] sm:$0xff] %v272
              $region56: #{spectral_conv3d.1} parent=50 // loop_footer
                %s263 = sadd.s32 1, %s259
              $region57: #{spectral_conv3d.1} parent=50 // loop_footer_branch
                %258 = sbr.rel target = $region53
              $region58: #{spectral_conv3d.1} parent=50 // loop_exit
                _
            $region51: #{spectral_conv3d.1} parent=46 // pred_fallthru
              _
            // Predicated region
            $region59: #{spectral_conv3d.1} parent=46 // pred_check
              _
            $region60: #{spectral_conv3d.1} parent=46 // pred_check_branch
              %275 = sbr.rel target = $region62
            $region61: #{spectral_conv3d.1} parent=46 // pred_region
              _
            $region62: #{spectral_conv3d.1} parent=46 // pred_fallthru
              _
          $region47: #{spectral_conv3d.1} parent=42 // pred_fallthru
            _
          %276 = vnop
        $region43: #{spectral_conv3d.1} parent=15 // pred_fallthru
          _
        // Predicated region
        $region63: #{spectral_conv3d.1} parent=15 // pred_check
          %p277 = pneg %p102
        $region64: #{spectral_conv3d.1} parent=15 // pred_check_branch
          %279 = sbr.rel (%p277) target = $region66
        $region65: #{spectral_conv3d.1} parent=15 // pred_region
          %s280 = sand.u32 %s92, 1
          %s281 = sand.u32 %s92, 1
          %s282 = smul.addr %s281, 128
          %s283 = scalar_lea.vmem [#allocation4], %s282
          %s284 = smul.u32 8, %s20
          %s285 = smul.u32 2, %s19
          %s286 = smul.addr %s284, 4
          %s287 = sadd.s32 %s285, %s286
          %s288 = smul.addr %s287, 8
          %s289 = scalar_lea.vmem %s2, %s288
          // Predicated region
          $region67: #{spectral_conv3d.1} parent=65 // pred_check
            _
          $region68: #{spectral_conv3d.1} parent=65 // pred_check_branch
            %291 = sbr.rel (0) target = $region70
          $region69: #{spectral_conv3d.1} parent=65 // pred_region
            // Predicated region
            $region71: #{spectral_conv3d.1} parent=69 // pred_check
              _
            $region72: #{spectral_conv3d.1} parent=69 // pred_check_branch
              %293 = sbr.rel (0) target = $region74
            $region73: #{spectral_conv3d.1} parent=69 // pred_region
              loop: start=0, step=1, limit=1
              $region75: #{spectral_conv3d.1} parent=73 // loop_pre_header
                _
              $region76: #{spectral_conv3d.1} parent=73 // loop_header
                %s295 = sphi 0, %s299
                %p296 = scmp.ge.s32.totalorder %s295, 1
                %s300 = sphi %s289, %s289
                %s301 = sphi %s283, %s283
              $region77: #{spectral_conv3d.1} parent=73 // loop_header_branch
                %298 = sbr.rel (%p296) target = $region81
              $region78: #{spectral_conv3d.1} parent=73 // loop_body
                %v302 = vld [vmem:[%s300] sm:$0xff]
                %303 = vst [vmem:[%s301] sm:$0xff] %v302
                %v304 = vld [vmem:[%s300 + $0x8] sm:$0xff]
                %305 = vst [vmem:[%s301 + $0x8] sm:$0xff] %v304
                %v306 = vld [vmem:[%s300 + $0x20] sm:$0xff]
                %307 = vst [vmem:[%s301 + $0x10] sm:$0xff] %v306
                %v308 = vld [vmem:[%s300 + $0x28] sm:$0xff]
                %309 = vst [vmem:[%s301 + $0x18] sm:$0xff] %v308
                %v310 = vld [vmem:[%s300 + $0x40] sm:$0xff]
                %311 = vst [vmem:[%s301 + $0x20] sm:$0xff] %v310
                %v312 = vld [vmem:[%s300 + $0x48] sm:$0xff]
                %313 = vst [vmem:[%s301 + $0x28] sm:$0xff] %v312
                %v314 = vld [vmem:[%s300 + $0x60] sm:$0xff]
                %315 = vst [vmem:[%s301 + $0x30] sm:$0xff] %v314
                %v316 = vld [vmem:[%s300 + $0x68] sm:$0xff]
                %317 = vst [vmem:[%s301 + $0x38] sm:$0xff] %v316
                %v318 = vld [vmem:[%s300 + $0x80] sm:$0xff]
                %319 = vst [vmem:[%s301 + $0x40] sm:$0xff] %v318
                %v320 = vld [vmem:[%s300 + $0x88] sm:$0xff]
                %321 = vst [vmem:[%s301 + $0x48] sm:$0xff] %v320
                %v322 = vld [vmem:[%s300 + $0xa0] sm:$0xff]
                %323 = vst [vmem:[%s301 + $0x50] sm:$0xff] %v322
                %v324 = vld [vmem:[%s300 + $0xa8] sm:$0xff]
                %325 = vst [vmem:[%s301 + $0x58] sm:$0xff] %v324
                %v326 = vld [vmem:[%s300 + $0xc0] sm:$0xff]
                %327 = vst [vmem:[%s301 + $0x60] sm:$0xff] %v326
                %v328 = vld [vmem:[%s300 + $0xc8] sm:$0xff]
                %329 = vst [vmem:[%s301 + $0x68] sm:$0xff] %v328
                %v330 = vld [vmem:[%s300 + $0xe0] sm:$0xff]
                %331 = vst [vmem:[%s301 + $0x70] sm:$0xff] %v330
                %v332 = vld [vmem:[%s300 + $0xe8] sm:$0xff]
                %333 = vst [vmem:[%s301 + $0x78] sm:$0xff] %v332
              $region79: #{spectral_conv3d.1} parent=73 // loop_footer
                %s299 = sadd.s32 1, %s295
              $region80: #{spectral_conv3d.1} parent=73 // loop_footer_branch
                %294 = sbr.rel target = $region76
              $region81: #{spectral_conv3d.1} parent=73 // loop_exit
                _
            $region74: #{spectral_conv3d.1} parent=69 // pred_fallthru
              _
            // Predicated region
            $region82: #{spectral_conv3d.1} parent=69 // pred_check
              _
            $region83: #{spectral_conv3d.1} parent=69 // pred_check_branch
              %335 = sbr.rel target = $region85
            $region84: #{spectral_conv3d.1} parent=69 // pred_region
              _
            $region85: #{spectral_conv3d.1} parent=69 // pred_fallthru
              _
          $region70: #{spectral_conv3d.1} parent=65 // pred_fallthru
            _
          %336 = vnop
        $region66: #{spectral_conv3d.1} parent=15 // pred_fallthru
          _
        // Predicated region
        $region86: #{spectral_conv3d.1} parent=15 // pred_check
          %p337 = pneg %p130
        $region87: #{spectral_conv3d.1} parent=15 // pred_check_branch
          %339 = sbr.rel (%p337) target = $region89
        $region88: #{spectral_conv3d.1} parent=15 // pred_region
          %s340 = sand.u32 %s120, 1
          %s341 = sand.u32 %s120, 1
          %s342 = smul.addr %s341, 128
          %s343 = scalar_lea.vmem [#allocation5], %s342
          %s344 = smul.u32 8, %s20
          %s345 = smul.u32 2, %s19
          %s346 = smul.addr %s344, 4
          %s347 = sadd.s32 %s345, %s346
          %s348 = smul.addr %s347, 8
          %s349 = scalar_lea.vmem %s3, %s348
          // Predicated region
          $region90: #{spectral_conv3d.1} parent=88 // pred_check
            _
          $region91: #{spectral_conv3d.1} parent=88 // pred_check_branch
            %351 = sbr.rel (0) target = $region93
          $region92: #{spectral_conv3d.1} parent=88 // pred_region
            // Predicated region
            $region94: #{spectral_conv3d.1} parent=92 // pred_check
              _
            $region95: #{spectral_conv3d.1} parent=92 // pred_check_branch
              %353 = sbr.rel (0) target = $region97
            $region96: #{spectral_conv3d.1} parent=92 // pred_region
              loop: start=0, step=1, limit=1
              $region98: #{spectral_conv3d.1} parent=96 // loop_pre_header
                _
              $region99: #{spectral_conv3d.1} parent=96 // loop_header
                %s355 = sphi 0, %s359
                %p356 = scmp.ge.s32.totalorder %s355, 1
                %s360 = sphi %s349, %s349
                %s361 = sphi %s343, %s343
              $region100: #{spectral_conv3d.1} parent=96 // loop_header_branch
                %358 = sbr.rel (%p356) target = $region104
              $region101: #{spectral_conv3d.1} parent=96 // loop_body
                %v362 = vld [vmem:[%s360] sm:$0xff]
                %363 = vst [vmem:[%s361] sm:$0xff] %v362
                %v364 = vld [vmem:[%s360 + $0x8] sm:$0xff]
                %365 = vst [vmem:[%s361 + $0x8] sm:$0xff] %v364
                %v366 = vld [vmem:[%s360 + $0x20] sm:$0xff]
                %367 = vst [vmem:[%s361 + $0x10] sm:$0xff] %v366
                %v368 = vld [vmem:[%s360 + $0x28] sm:$0xff]
                %369 = vst [vmem:[%s361 + $0x18] sm:$0xff] %v368
                %v370 = vld [vmem:[%s360 + $0x40] sm:$0xff]
                %371 = vst [vmem:[%s361 + $0x20] sm:$0xff] %v370
                %v372 = vld [vmem:[%s360 + $0x48] sm:$0xff]
                %373 = vst [vmem:[%s361 + $0x28] sm:$0xff] %v372
                %v374 = vld [vmem:[%s360 + $0x60] sm:$0xff]
                %375 = vst [vmem:[%s361 + $0x30] sm:$0xff] %v374
                %v376 = vld [vmem:[%s360 + $0x68] sm:$0xff]
                %377 = vst [vmem:[%s361 + $0x38] sm:$0xff] %v376
                %v378 = vld [vmem:[%s360 + $0x80] sm:$0xff]
                %379 = vst [vmem:[%s361 + $0x40] sm:$0xff] %v378
                %v380 = vld [vmem:[%s360 + $0x88] sm:$0xff]
                %381 = vst [vmem:[%s361 + $0x48] sm:$0xff] %v380
                %v382 = vld [vmem:[%s360 + $0xa0] sm:$0xff]
                %383 = vst [vmem:[%s361 + $0x50] sm:$0xff] %v382
                %v384 = vld [vmem:[%s360 + $0xa8] sm:$0xff]
                %385 = vst [vmem:[%s361 + $0x58] sm:$0xff] %v384
                %v386 = vld [vmem:[%s360 + $0xc0] sm:$0xff]
                %387 = vst [vmem:[%s361 + $0x60] sm:$0xff] %v386
                %v388 = vld [vmem:[%s360 + $0xc8] sm:$0xff]
                %389 = vst [vmem:[%s361 + $0x68] sm:$0xff] %v388
                %v390 = vld [vmem:[%s360 + $0xe0] sm:$0xff]
                %391 = vst [vmem:[%s361 + $0x70] sm:$0xff] %v390
                %v392 = vld [vmem:[%s360 + $0xe8] sm:$0xff]
                %393 = vst [vmem:[%s361 + $0x78] sm:$0xff] %v392
              $region102: #{spectral_conv3d.1} parent=96 // loop_footer
                %s359 = sadd.s32 1, %s355
              $region103: #{spectral_conv3d.1} parent=96 // loop_footer_branch
                %354 = sbr.rel target = $region99
              $region104: #{spectral_conv3d.1} parent=96 // loop_exit
                _
            $region97: #{spectral_conv3d.1} parent=92 // pred_fallthru
              _
            // Predicated region
            $region105: #{spectral_conv3d.1} parent=92 // pred_check
              _
            $region106: #{spectral_conv3d.1} parent=92 // pred_check_branch
              %395 = sbr.rel target = $region108
            $region107: #{spectral_conv3d.1} parent=92 // pred_region
              _
            $region108: #{spectral_conv3d.1} parent=92 // pred_fallthru
              _
          $region93: #{spectral_conv3d.1} parent=88 // pred_fallthru
            _
          %396 = vnop
        $region89: #{spectral_conv3d.1} parent=15 // pred_fallthru
          _
      $region16: #{spectral_conv3d.1} parent=5 // pred_fallthru
        _
      %p397 = scmp.le.s32.totalorder 1, %s12
      %p398 = scmp.lt.s32.totalorder %s12, 3
      %p399 = pnand %p397, %p398
      %p400 = pneg %p399
      // Predicated region
      $region109: #{spectral_conv3d.1} parent=5 // pred_check
        _
      $region110: #{spectral_conv3d.1} parent=5 // pred_check_branch
        %402 = sbr.rel (%p399) target = $region112
      $region111: #{spectral_conv3d.1} parent=5 // pred_region
        %s403 = ssub.s32 %s12, 1
        %s404 = sand.u32 %s39, 1
        %s405 = sand.u32 %s39, 1
        %s406 = smul.addr %s405, 32
        %s407 = scalar_lea.vmem [#allocation2], %s406
        // Predicated region
        $region113: #{spectral_conv3d.1} parent=111 // pred_check
          %p408 = pneg %p52
        $region114: #{spectral_conv3d.1} parent=111 // pred_check_branch
          %410 = sbr.rel (%p408) target = $region116
        $region115: #{spectral_conv3d.1} parent=111 // pred_region
          _
        $region116: #{spectral_conv3d.1} parent=111 // pred_fallthru
          _
        %s411 = sand.u32 %s67, 1
        %s412 = sand.u32 %s67, 1
        %s413 = smul.addr %s412, 32
        %s414 = scalar_lea.vmem [#allocation3], %s413
        // Predicated region
        $region117: #{spectral_conv3d.1} parent=111 // pred_check
          %p415 = pneg %p80
        $region118: #{spectral_conv3d.1} parent=111 // pred_check_branch
          %417 = sbr.rel (%p415) target = $region120
        $region119: #{spectral_conv3d.1} parent=111 // pred_region
          _
        $region120: #{spectral_conv3d.1} parent=111 // pred_fallthru
          _
        %s418 = sand.u32 %s95, 1
        %s419 = sand.u32 %s95, 1
        %s420 = smul.addr %s419, 128
        %s421 = scalar_lea.vmem [#allocation4], %s420
        // Predicated region
        $region121: #{spectral_conv3d.1} parent=111 // pred_check
          %p422 = pneg %p108
        $region122: #{spectral_conv3d.1} parent=111 // pred_check_branch
          %424 = sbr.rel (%p422) target = $region124
        $region123: #{spectral_conv3d.1} parent=111 // pred_region
          _
        $region124: #{spectral_conv3d.1} parent=111 // pred_fallthru
          _
        %s425 = sand.u32 %s123, 1
        %s426 = sand.u32 %s123, 1
        %s427 = smul.addr %s426, 128
        %s428 = scalar_lea.vmem [#allocation5], %s427
        // Predicated region
        $region125: #{spectral_conv3d.1} parent=111 // pred_check
          %p429 = pneg %p136
        $region126: #{spectral_conv3d.1} parent=111 // pred_check_branch
          %431 = sbr.rel (%p429) target = $region128
        $region127: #{spectral_conv3d.1} parent=111 // pred_region
          _
        $region128: #{spectral_conv3d.1} parent=111 // pred_fallthru
          _
        %s432 = sand.u32 %s39, 1
        %s433 = sand.u32 %s39, 1
        %s434 = smul.addr %s433, 32
        %s435 = scalar_lea.vmem [#allocation2], %s434
        %p436 = pneg %p52
        %p437 = pneg %p49
        %s438 = sand.u32 %s67, 1
        %s439 = sand.u32 %s67, 1
        %s440 = smul.addr %s439, 32
        %s441 = scalar_lea.vmem [#allocation3], %s440
        %p442 = pneg %p80
        %p443 = pneg %p77
        %s444 = sand.u32 %s95, 1
        %s445 = sand.u32 %s95, 1
        %s446 = smul.addr %s445, 128
        %s447 = scalar_lea.vmem [#allocation4], %s446
        %p448 = pneg %p108
        %p449 = pneg %p105
        %s450 = sand.u32 %s123, 1
        %s451 = sand.u32 %s123, 1
        %s452 = smul.addr %s451, 128
        %s453 = scalar_lea.vmem [#allocation5], %s452
        %p454 = pneg %p136
        %p455 = pneg %p133
        %p456 = pneg %p162
        %p457 = pneg %p159
        %s458 = sand.u32 %s149, 1
        %s459 = sand.u32 %s149, 1
        %s460 = smul.addr %s459, 32
        %s461 = scalar_lea.vmem [#allocation6], %s460
        %p462 = pneg %p188
        %p463 = pneg %p185
        %s464 = sand.u32 %s175, 1
        %s465 = sand.u32 %s175, 1
        %s466 = smul.addr %s465, 32
        %s467 = scalar_lea.vmem [#allocation7], %s466
        %s468 = smul.u32 2, %s21
        %s469 = smul.u32 2, %s21
        %s470 = smul.u32 8, %s22
        %s471 = smul.u32 2, %s21
        %s472 = smul.u32 8, %s22
        %s473 = smul.u32 2, %s21
        %s474 = smul.u32 2, %s21
        %s475 = smul.u32 2, %s21
        %v476 = vld [vmem:[%s407] ss:$8 sm:$0x3]
        %v478 = vperm.slane %v476, 0
        %v479 = vperm.slane %v476, 1
        %v482 = vld [vmem:[%s414] ss:$8 sm:$0x3]
        %v484 = vperm.slane %v482, 0
        %v485 = vperm.slane %v482, 1
        %v488 = vld [vmem:[%s421] sm:$0xff]
        %v489 = vld [vmem:[%s421 + $0x8] sm:$0xff]
        %v490 = vld [vmem:[%s428] sm:$0xff]
        %v491 = vld [vmem:[%s428 + $0x8] sm:$0xff]
        %v492 = vmul.f32 %v478, %v488
        %v493 = vmul.f32 %v479, %v489
        %v494 = vmul.f32 %v484, %v490
        %v495 = vmul.f32 %v485, %v491
        %v496 = vsub.f32 %v492, %v494
        %v497 = vsub.f32 %v493, %v495
        %v498 = vadd.f32 %v496, 0.0
        %v499 = vadd.f32 %v497, 0.0
        %v500 = vmul.f32 %v478, %v490
        %v501 = vmul.f32 %v479, %v491
        %v502 = vmul.f32 %v484, %v488
        %v503 = vmul.f32 %v485, %v489
        %v504 = vadd.f32 %v500, %v502
        %v505 = vadd.f32 %v501, %v503
        %v506 = vadd.f32 %v504, 0.0
        %v507 = vadd.f32 %v505, 0.0
        %s508 = scalar_lea.vmem %s407, 1 [#allocation2]
        %v509 = vld [vmem:[%s508] ss:$8 sm:$0x3]
        %v511 = vperm.slane %v509, 0
        %v512 = vperm.slane %v509, 1
        %s515 = scalar_lea.vmem %s414, 1 [#allocation3]
        %v516 = vld [vmem:[%s515] ss:$8 sm:$0x3]
        %v518 = vperm.slane %v516, 0
        %v519 = vperm.slane %v516, 1
        %s522 = scalar_lea.vmem %s421, 16 [#allocation4]
        %v523 = vld [vmem:[%s522] sm:$0xff]
        %v524 = vld [vmem:[%s522 + $0x8] sm:$0xff]
        %s525 = scalar_lea.vmem %s428, 16 [#allocation5]
        %v526 = vld [vmem:[%s525] sm:$0xff]
        %v527 = vld [vmem:[%s525 + $0x8] sm:$0xff]
        %v528 = vmul.f32 %v511, %v523
        %v529 = vmul.f32 %v512, %v524
        %v530 = vmul.f32 %v518, %v526
        %v531 = vmul.f32 %v519, %v527
        %v532 = vsub.f32 %v528, %v530
        %v533 = vsub.f32 %v529, %v531
        %v534 = vadd.f32 %v498, %v532
        %v535 = vadd.f32 %v499, %v533
        %v536 = vmul.f32 %v511, %v526
        %v537 = vmul.f32 %v512, %v527
        %v538 = vmul.f32 %v518, %v523
        %v539 = vmul.f32 %v519, %v524
        %v540 = vadd.f32 %v536, %v538
        %v541 = vadd.f32 %v537, %v539
        %v542 = vadd.f32 %v506, %v540
        %v543 = vadd.f32 %v507, %v541
        %s544 = scalar_lea.vmem %s407, 2 [#allocation2]
        %v545 = vld [vmem:[%s544] ss:$8 sm:$0x3]
        %v547 = vperm.slane %v545, 0
        %v548 = vperm.slane %v545, 1
        %s551 = scalar_lea.vmem %s414, 2 [#allocation3]
        %v552 = vld [vmem:[%s551] ss:$8 sm:$0x3]
        %v554 = vperm.slane %v552, 0
        %v555 = vperm.slane %v552, 1
        %s558 = scalar_lea.vmem %s421, 32 [#allocation4]
        %v559 = vld [vmem:[%s558] sm:$0xff]
        %v560 = vld [vmem:[%s558 + $0x8] sm:$0xff]
        %s561 = scalar_lea.vmem %s428, 32 [#allocation5]
        %v562 = vld [vmem:[%s561] sm:$0xff]
        %v563 = vld [vmem:[%s561 + $0x8] sm:$0xff]
        %v564 = vmul.f32 %v547, %v559
        %v565 = vmul.f32 %v548, %v560
        %v566 = vmul.f32 %v554, %v562
        %v567 = vmul.f32 %v555, %v563
        %v568 = vsub.f32 %v564, %v566
        %v569 = vsub.f32 %v565, %v567
        %v570 = vadd.f32 %v534, %v568
        %v571 = vadd.f32 %v535, %v569
        %v572 = vmul.f32 %v547, %v562
        %v573 = vmul.f32 %v548, %v563
        %v574 = vmul.f32 %v554, %v559
        %v575 = vmul.f32 %v555, %v560
        %v576 = vadd.f32 %v572, %v574
        %v577 = vadd.f32 %v573, %v575
        %v578 = vadd.f32 %v542, %v576
        %v579 = vadd.f32 %v543, %v577
        %s580 = scalar_lea.vmem %s407, 3 [#allocation2]
        %v581 = vld [vmem:[%s580] ss:$8 sm:$0x3]
        %v583 = vperm.slane %v581, 0
        %v584 = vperm.slane %v581, 1
        %s587 = scalar_lea.vmem %s414, 3 [#allocation3]
        %v588 = vld [vmem:[%s587] ss:$8 sm:$0x3]
        %v590 = vperm.slane %v588, 0
        %v591 = vperm.slane %v588, 1
        %s594 = scalar_lea.vmem %s421, 48 [#allocation4]
        %v595 = vld [vmem:[%s594] sm:$0xff]
        %v596 = vld [vmem:[%s594 + $0x8] sm:$0xff]
        %s597 = scalar_lea.vmem %s428, 48 [#allocation5]
        %v598 = vld [vmem:[%s597] sm:$0xff]
        %v599 = vld [vmem:[%s597 + $0x8] sm:$0xff]
        %v600 = vmul.f32 %v583, %v595
        %v601 = vmul.f32 %v584, %v596
        %v602 = vmul.f32 %v590, %v598
        %v603 = vmul.f32 %v591, %v599
        %v604 = vsub.f32 %v600, %v602
        %v605 = vsub.f32 %v601, %v603
        %v606 = vadd.f32 %v570, %v604
        %v607 = vadd.f32 %v571, %v605
        %v608 = vmul.f32 %v583, %v598
        %v609 = vmul.f32 %v584, %v599
        %v610 = vmul.f32 %v590, %v595
        %v611 = vmul.f32 %v591, %v596
        %v612 = vadd.f32 %v608, %v610
        %v613 = vadd.f32 %v609, %v611
        %v614 = vadd.f32 %v578, %v612
        %v615 = vadd.f32 %v579, %v613
        %s616 = scalar_lea.vmem %s407, 4 [#allocation2]
        %v617 = vld [vmem:[%s616] ss:$8 sm:$0x3]
        %v619 = vperm.slane %v617, 0
        %v620 = vperm.slane %v617, 1
        %s623 = scalar_lea.vmem %s414, 4 [#allocation3]
        %v624 = vld [vmem:[%s623] ss:$8 sm:$0x3]
        %v626 = vperm.slane %v624, 0
        %v627 = vperm.slane %v624, 1
        %s630 = scalar_lea.vmem %s421, 64 [#allocation4]
        %v631 = vld [vmem:[%s630] sm:$0xff]
        %v632 = vld [vmem:[%s630 + $0x8] sm:$0xff]
        %s633 = scalar_lea.vmem %s428, 64 [#allocation5]
        %v634 = vld [vmem:[%s633] sm:$0xff]
        %v635 = vld [vmem:[%s633 + $0x8] sm:$0xff]
        %v636 = vmul.f32 %v619, %v631
        %v637 = vmul.f32 %v620, %v632
        %v638 = vmul.f32 %v626, %v634
        %v639 = vmul.f32 %v627, %v635
        %v640 = vsub.f32 %v636, %v638
        %v641 = vsub.f32 %v637, %v639
        %v642 = vadd.f32 %v606, %v640
        %v643 = vadd.f32 %v607, %v641
        %v644 = vmul.f32 %v619, %v634
        %v645 = vmul.f32 %v620, %v635
        %v646 = vmul.f32 %v626, %v631
        %v647 = vmul.f32 %v627, %v632
        %v648 = vadd.f32 %v644, %v646
        %v649 = vadd.f32 %v645, %v647
        %v650 = vadd.f32 %v614, %v648
        %v651 = vadd.f32 %v615, %v649
        %s652 = scalar_lea.vmem %s407, 5 [#allocation2]
        %v653 = vld [vmem:[%s652] ss:$8 sm:$0x3]
        %v655 = vperm.slane %v653, 0
        %v656 = vperm.slane %v653, 1
        %s659 = scalar_lea.vmem %s414, 5 [#allocation3]
        %v660 = vld [vmem:[%s659] ss:$8 sm:$0x3]
        %v662 = vperm.slane %v660, 0
        %v663 = vperm.slane %v660, 1
        %s666 = scalar_lea.vmem %s421, 80 [#allocation4]
        %v667 = vld [vmem:[%s666] sm:$0xff]
        %v668 = vld [vmem:[%s666 + $0x8] sm:$0xff]
        %s669 = scalar_lea.vmem %s428, 80 [#allocation5]
        %v670 = vld [vmem:[%s669] sm:$0xff]
        %v671 = vld [vmem:[%s669 + $0x8] sm:$0xff]
        %v672 = vmul.f32 %v655, %v667
        %v673 = vmul.f32 %v656, %v668
        %v674 = vmul.f32 %v662, %v670
        %v675 = vmul.f32 %v663, %v671
        %v676 = vsub.f32 %v672, %v674
        %v677 = vsub.f32 %v673, %v675
        %v678 = vadd.f32 %v642, %v676
        %v679 = vadd.f32 %v643, %v677
        %v680 = vmul.f32 %v655, %v670
        %v681 = vmul.f32 %v656, %v671
        %v682 = vmul.f32 %v662, %v667
        %v683 = vmul.f32 %v663, %v668
        %v684 = vadd.f32 %v680, %v682
        %v685 = vadd.f32 %v681, %v683
        %v686 = vadd.f32 %v650, %v684
        %v687 = vadd.f32 %v651, %v685
        %s688 = scalar_lea.vmem %s407, 6 [#allocation2]
        %v689 = vld [vmem:[%s688] ss:$8 sm:$0x3]
        %v691 = vperm.slane %v689, 0
        %v692 = vperm.slane %v689, 1
        %s695 = scalar_lea.vmem %s414, 6 [#allocation3]
        %v696 = vld [vmem:[%s695] ss:$8 sm:$0x3]
        %v698 = vperm.slane %v696, 0
        %v699 = vperm.slane %v696, 1
        %s702 = scalar_lea.vmem %s421, 96 [#allocation4]
        %v703 = vld [vmem:[%s702] sm:$0xff]
        %v704 = vld [vmem:[%s702 + $0x8] sm:$0xff]
        %s705 = scalar_lea.vmem %s428, 96 [#allocation5]
        %v706 = vld [vmem:[%s705] sm:$0xff]
        %v707 = vld [vmem:[%s705 + $0x8] sm:$0xff]
        %v708 = vmul.f32 %v691, %v703
        %v709 = vmul.f32 %v692, %v704
        %v710 = vmul.f32 %v698, %v706
        %v711 = vmul.f32 %v699, %v707
        %v712 = vsub.f32 %v708, %v710
        %v713 = vsub.f32 %v709, %v711
        %v714 = vadd.f32 %v678, %v712
        %v715 = vadd.f32 %v679, %v713
        %v716 = vmul.f32 %v691, %v706
        %v717 = vmul.f32 %v692, %v707
        %v718 = vmul.f32 %v698, %v703
        %v719 = vmul.f32 %v699, %v704
        %v720 = vadd.f32 %v716, %v718
        %v721 = vadd.f32 %v717, %v719
        %v722 = vadd.f32 %v686, %v720
        %v723 = vadd.f32 %v687, %v721
        %s724 = scalar_lea.vmem %s407, 7 [#allocation2]
        %v725 = vld [vmem:[%s724] ss:$8 sm:$0x3]
        %v727 = vperm.slane %v725, 0
        %v728 = vperm.slane %v725, 1
        %s731 = scalar_lea.vmem %s414, 7 [#allocation3]
        %v732 = vld [vmem:[%s731] ss:$8 sm:$0x3]
        %v734 = vperm.slane %v732, 0
        %v735 = vperm.slane %v732, 1
        %s738 = scalar_lea.vmem %s421, 112 [#allocation4]
        %v739 = vld [vmem:[%s738] sm:$0xff]
        %v740 = vld [vmem:[%s738 + $0x8] sm:$0xff]
        %s741 = scalar_lea.vmem %s428, 112 [#allocation5]
        %v742 = vld [vmem:[%s741] sm:$0xff]
        %v743 = vld [vmem:[%s741 + $0x8] sm:$0xff]
        %v744 = vmul.f32 %v727, %v739
        %v745 = vmul.f32 %v728, %v740
        %v746 = vmul.f32 %v734, %v742
        %v747 = vmul.f32 %v735, %v743
        %v748 = vsub.f32 %v744, %v746
        %v749 = vsub.f32 %v745, %v747
        %v750 = vadd.f32 %v714, %v748
        %v751 = vadd.f32 %v715, %v749
        %v752 = vmul.f32 %v727, %v742
        %v753 = vmul.f32 %v728, %v743
        %v754 = vmul.f32 %v734, %v739
        %v755 = vmul.f32 %v735, %v740
        %v756 = vadd.f32 %v752, %v754
        %v757 = vadd.f32 %v753, %v755
        %v758 = vadd.f32 %v722, %v756
        %v759 = vadd.f32 %v723, %v757
        %760 = vst [vmem:[%s461] sm:$0xff] %v750
        %761 = vst [vmem:[%s461 + $0x8] sm:$0xff] %v751
        %762 = vst [vmem:[%s467] sm:$0xff] %v758
        %763 = vst [vmem:[%s467 + $0x8] sm:$0xff] %v759
        %s764 = scalar_lea.vmem %s407, 16 [#allocation2]
        %v765 = vld [vmem:[%s764] ss:$8 sm:$0x3]
        %v767 = vperm.slane %v765, 0
        %v768 = vperm.slane %v765, 1
        %s771 = scalar_lea.vmem %s414, 16 [#allocation3]
        %v772 = vld [vmem:[%s771] ss:$8 sm:$0x3]
        %v774 = vperm.slane %v772, 0
        %v775 = vperm.slane %v772, 1
        %v778 = vld [vmem:[%s421] sm:$0xff]
        %v779 = vld [vmem:[%s421 + $0x8] sm:$0xff]
        %v780 = vld [vmem:[%s428] sm:$0xff]
        %v781 = vld [vmem:[%s428 + $0x8] sm:$0xff]
        %v782 = vmul.f32 %v767, %v778
        %v783 = vmul.f32 %v768, %v779
        %v784 = vmul.f32 %v774, %v780
        %v785 = vmul.f32 %v775, %v781
        %v786 = vsub.f32 %v782, %v784
        %v787 = vsub.f32 %v783, %v785
        %v788 = vadd.f32 %v786, 0.0
        %v789 = vadd.f32 %v787, 0.0
        %v790 = vmul.f32 %v767, %v780
        %v791 = vmul.f32 %v768, %v781
        %v792 = vmul.f32 %v774, %v778
        %v793 = vmul.f32 %v775, %v779
        %v794 = vadd.f32 %v790, %v792
        %v795 = vadd.f32 %v791, %v793
        %v796 = vadd.f32 %v794, 0.0
        %v797 = vadd.f32 %v795, 0.0
        %s798 = scalar_lea.vmem %s764, 1 [#allocation2]
        %v799 = vld [vmem:[%s798] ss:$8 sm:$0x3]
        %v801 = vperm.slane %v799, 0
        %v802 = vperm.slane %v799, 1
        %s805 = scalar_lea.vmem %s771, 1 [#allocation3]
        %v806 = vld [vmem:[%s805] ss:$8 sm:$0x3]
        %v808 = vperm.slane %v806, 0
        %v809 = vperm.slane %v806, 1
        %v812 = vld [vmem:[%s522] sm:$0xff]
        %v813 = vld [vmem:[%s522 + $0x8] sm:$0xff]
        %v814 = vld [vmem:[%s525] sm:$0xff]
        %v815 = vld [vmem:[%s525 + $0x8] sm:$0xff]
        %v816 = vmul.f32 %v801, %v812
        %v817 = vmul.f32 %v802, %v813
        %v818 = vmul.f32 %v808, %v814
        %v819 = vmul.f32 %v809, %v815
        %v820 = vsub.f32 %v816, %v818
        %v821 = vsub.f32 %v817, %v819
        %v822 = vadd.f32 %v788, %v820
        %v823 = vadd.f32 %v789, %v821
        %v824 = vmul.f32 %v801, %v814
        %v825 = vmul.f32 %v802, %v815
        %v826 = vmul.f32 %v808, %v812
        %v827 = vmul.f32 %v809, %v813
        %v828 = vadd.f32 %v824, %v826
        %v829 = vadd.f32 %v825, %v827
        %v830 = vadd.f32 %v796, %v828
        %v831 = vadd.f32 %v797, %v829
        %s832 = scalar_lea.vmem %s764, 2 [#allocation2]
        %v833 = vld [vmem:[%s832] ss:$8 sm:$0x3]
        %v835 = vperm.slane %v833, 0
        %v836 = vperm.slane %v833, 1
        %s839 = scalar_lea.vmem %s771, 2 [#allocation3]
        %v840 = vld [vmem:[%s839] ss:$8 sm:$0x3]
        %v842 = vperm.slane %v840, 0
        %v843 = vperm.slane %v840, 1
        %v846 = vld [vmem:[%s558] sm:$0xff]
        %v847 = vld [vmem:[%s558 + $0x8] sm:$0xff]
        %v848 = vld [vmem:[%s561] sm:$0xff]
        %v849 = vld [vmem:[%s561 + $0x8] sm:$0xff]
        %v850 = vmul.f32 %v835, %v846
        %v851 = vmul.f32 %v836, %v847
        %v852 = vmul.f32 %v842, %v848
        %v853 = vmul.f32 %v843, %v849
        %v854 = vsub.f32 %v850, %v852
        %v855 = vsub.f32 %v851, %v853
        %v856 = vadd.f32 %v822, %v854
        %v857 = vadd.f32 %v823, %v855
        %v858 = vmul.f32 %v835, %v848
        %v859 = vmul.f32 %v836, %v849
        %v860 = vmul.f32 %v842, %v846
        %v861 = vmul.f32 %v843, %v847
        %v862 = vadd.f32 %v858, %v860
        %v863 = vadd.f32 %v859, %v861
        %v864 = vadd.f32 %v830, %v862
        %v865 = vadd.f32 %v831, %v863
        %s866 = scalar_lea.vmem %s764, 3 [#allocation2]
        %v867 = vld [vmem:[%s866] ss:$8 sm:$0x3]
        %v869 = vperm.slane %v867, 0
        %v870 = vperm.slane %v867, 1
        %s873 = scalar_lea.vmem %s771, 3 [#allocation3]
        %v874 = vld [vmem:[%s873] ss:$8 sm:$0x3]
        %v876 = vperm.slane %v874, 0
        %v877 = vperm.slane %v874, 1
        %v880 = vld [vmem:[%s594] sm:$0xff]
        %v881 = vld [vmem:[%s594 + $0x8] sm:$0xff]
        %v882 = vld [vmem:[%s597] sm:$0xff]
        %v883 = vld [vmem:[%s597 + $0x8] sm:$0xff]
        %v884 = vmul.f32 %v869, %v880
        %v885 = vmul.f32 %v870, %v881
        %v886 = vmul.f32 %v876, %v882
        %v887 = vmul.f32 %v877, %v883
        %v888 = vsub.f32 %v884, %v886
        %v889 = vsub.f32 %v885, %v887
        %v890 = vadd.f32 %v856, %v888
        %v891 = vadd.f32 %v857, %v889
        %v892 = vmul.f32 %v869, %v882
        %v893 = vmul.f32 %v870, %v883
        %v894 = vmul.f32 %v876, %v880
        %v895 = vmul.f32 %v877, %v881
        %v896 = vadd.f32 %v892, %v894
        %v897 = vadd.f32 %v893, %v895
        %v898 = vadd.f32 %v864, %v896
        %v899 = vadd.f32 %v865, %v897
        %s900 = scalar_lea.vmem %s764, 4 [#allocation2]
        %v901 = vld [vmem:[%s900] ss:$8 sm:$0x3]
        %v903 = vperm.slane %v901, 0
        %v904 = vperm.slane %v901, 1
        %s907 = scalar_lea.vmem %s771, 4 [#allocation3]
        %v908 = vld [vmem:[%s907] ss:$8 sm:$0x3]
        %v910 = vperm.slane %v908, 0
        %v911 = vperm.slane %v908, 1
        %v914 = vld [vmem:[%s630] sm:$0xff]
        %v915 = vld [vmem:[%s630 + $0x8] sm:$0xff]
        %v916 = vld [vmem:[%s633] sm:$0xff]
        %v917 = vld [vmem:[%s633 + $0x8] sm:$0xff]
        %v918 = vmul.f32 %v903, %v914
        %v919 = vmul.f32 %v904, %v915
        %v920 = vmul.f32 %v910, %v916
        %v921 = vmul.f32 %v911, %v917
        %v922 = vsub.f32 %v918, %v920
        %v923 = vsub.f32 %v919, %v921
        %v924 = vadd.f32 %v890, %v922
        %v925 = vadd.f32 %v891, %v923
        %v926 = vmul.f32 %v903, %v916
        %v927 = vmul.f32 %v904, %v917
        %v928 = vmul.f32 %v910, %v914
        %v929 = vmul.f32 %v911, %v915
        %v930 = vadd.f32 %v926, %v928
        %v931 = vadd.f32 %v927, %v929
        %v932 = vadd.f32 %v898, %v930
        %v933 = vadd.f32 %v899, %v931
        %s934 = scalar_lea.vmem %s764, 5 [#allocation2]
        %v935 = vld [vmem:[%s934] ss:$8 sm:$0x3]
        %v937 = vperm.slane %v935, 0
        %v938 = vperm.slane %v935, 1
        %s941 = scalar_lea.vmem %s771, 5 [#allocation3]
        %v942 = vld [vmem:[%s941] ss:$8 sm:$0x3]
        %v944 = vperm.slane %v942, 0
        %v945 = vperm.slane %v942, 1
        %v948 = vld [vmem:[%s666] sm:$0xff]
        %v949 = vld [vmem:[%s666 + $0x8] sm:$0xff]
        %v950 = vld [vmem:[%s669] sm:$0xff]
        %v951 = vld [vmem:[%s669 + $0x8] sm:$0xff]
        %v952 = vmul.f32 %v937, %v948
        %v953 = vmul.f32 %v938, %v949
        %v954 = vmul.f32 %v944, %v950
        %v955 = vmul.f32 %v945, %v951
        %v956 = vsub.f32 %v952, %v954
        %v957 = vsub.f32 %v953, %v955
        %v958 = vadd.f32 %v924, %v956
        %v959 = vadd.f32 %v925, %v957
        %v960 = vmul.f32 %v937, %v950
        %v961 = vmul.f32 %v938, %v951
        %v962 = vmul.f32 %v944, %v948
        %v963 = vmul.f32 %v945, %v949
        %v964 = vadd.f32 %v960, %v962
        %v965 = vadd.f32 %v961, %v963
        %v966 = vadd.f32 %v932, %v964
        %v967 = vadd.f32 %v933, %v965
        %s968 = scalar_lea.vmem %s764, 6 [#allocation2]
        %v969 = vld [vmem:[%s968] ss:$8 sm:$0x3]
        %v971 = vperm.slane %v969, 0
        %v972 = vperm.slane %v969, 1
        %s975 = scalar_lea.vmem %s771, 6 [#allocation3]
        %v976 = vld [vmem:[%s975] ss:$8 sm:$0x3]
        %v978 = vperm.slane %v976, 0
        %v979 = vperm.slane %v976, 1
        %v982 = vld [vmem:[%s702] sm:$0xff]
        %v983 = vld [vmem:[%s702 + $0x8] sm:$0xff]
        %v984 = vld [vmem:[%s705] sm:$0xff]
        %v985 = vld [vmem:[%s705 + $0x8] sm:$0xff]
        %v986 = vmul.f32 %v971, %v982
        %v987 = vmul.f32 %v972, %v983
        %v988 = vmul.f32 %v978, %v984
        %v989 = vmul.f32 %v979, %v985
        %v990 = vsub.f32 %v986, %v988
        %v991 = vsub.f32 %v987, %v989
        %v992 = vadd.f32 %v958, %v990
        %v993 = vadd.f32 %v959, %v991
        %v994 = vmul.f32 %v971, %v984
        %v995 = vmul.f32 %v972, %v985
        %v996 = vmul.f32 %v978, %v982
        %v997 = vmul.f32 %v979, %v983
        %v998 = vadd.f32 %v994, %v996
        %v999 = vadd.f32 %v995, %v997
        %v1000 = vadd.f32 %v966, %v998
        %v1001 = vadd.f32 %v967, %v999
        %s1002 = scalar_lea.vmem %s764, 7 [#allocation2]
        %v1003 = vld [vmem:[%s1002] ss:$8 sm:$0x3]
        %v1005 = vperm.slane %v1003, 0
        %v1006 = vperm.slane %v1003, 1
        %s1009 = scalar_lea.vmem %s771, 7 [#allocation3]
        %v1010 = vld [vmem:[%s1009] ss:$8 sm:$0x3]
        %v1012 = vperm.slane %v1010, 0
        %v1013 = vperm.slane %v1010, 1
        %v1016 = vld [vmem:[%s738] sm:$0xff]
        %v1017 = vld [vmem:[%s738 + $0x8] sm:$0xff]
        %v1018 = vld [vmem:[%s741] sm:$0xff]
        %v1019 = vld [vmem:[%s741 + $0x8] sm:$0xff]
        %v1020 = vmul.f32 %v1005, %v1016
        %v1021 = vmul.f32 %v1006, %v1017
        %v1022 = vmul.f32 %v1012, %v1018
        %v1023 = vmul.f32 %v1013, %v1019
        %v1024 = vsub.f32 %v1020, %v1022
        %v1025 = vsub.f32 %v1021, %v1023
        %v1026 = vadd.f32 %v992, %v1024
        %v1027 = vadd.f32 %v993, %v1025
        %v1028 = vmul.f32 %v1005, %v1018
        %v1029 = vmul.f32 %v1006, %v1019
        %v1030 = vmul.f32 %v1012, %v1016
        %v1031 = vmul.f32 %v1013, %v1017
        %v1032 = vadd.f32 %v1028, %v1030
        %v1033 = vadd.f32 %v1029, %v1031
        %v1034 = vadd.f32 %v1000, %v1032
        %v1035 = vadd.f32 %v1001, %v1033
        %s1036 = scalar_lea.vmem %s461, 16 [#allocation6]
        %1037 = vst [vmem:[%s1036] sm:$0xff] %v1026
        %1038 = vst [vmem:[%s1036 + $0x8] sm:$0xff] %v1027
        %s1039 = scalar_lea.vmem %s467, 16 [#allocation7]
        %1040 = vst [vmem:[%s1039] sm:$0xff] %v1034
        %1041 = vst [vmem:[%s1039 + $0x8] sm:$0xff] %v1035
        %s1042 = sand.u32 %s149, 1
        %s1043 = sand.u32 %s149, 1
        %s1044 = smul.addr %s1043, 32
        %s1045 = scalar_lea.vmem [#allocation6], %s1044
        %s1046 = sand.u32 %s175, 1
        %s1047 = sand.u32 %s175, 1
        %s1048 = smul.addr %s1047, 32
        %s1049 = scalar_lea.vmem [#allocation7], %s1048
        // Predicated region
        $region129: #{spectral_conv3d.1} parent=111 // pred_check
          %p1050 = pneg %p159
        $region130: #{spectral_conv3d.1} parent=111 // pred_check_branch
          %1052 = sbr.rel (%p1050) target = $region132
        $region131: #{spectral_conv3d.1} parent=111 // pred_region
          %s1053 = smul.u32 2, %s21
          %s1054 = smul.addr %s1053, 8
          %s1055 = scalar_lea.vmem %s4, %s1054
          // Predicated region
          $region133: #{spectral_conv3d.1} parent=131 // pred_check
            _
          $region134: #{spectral_conv3d.1} parent=131 // pred_check_branch
            %1057 = sbr.rel (0) target = $region136
          $region135: #{spectral_conv3d.1} parent=131 // pred_region
            // Predicated region
            $region137: #{spectral_conv3d.1} parent=135 // pred_check
              _
            $region138: #{spectral_conv3d.1} parent=135 // pred_check_branch
              %1059 = sbr.rel (0) target = $region140
            $region139: #{spectral_conv3d.1} parent=135 // pred_region
              loop: start=0, step=1, limit=1
              $region141: #{spectral_conv3d.1} parent=139 // loop_pre_header
                _
              $region142: #{spectral_conv3d.1} parent=139 // loop_header
                %s1061 = sphi 0, %s1065
                %p1062 = scmp.ge.s32.totalorder %s1061, 1
                %s1066 = sphi %s1045, %s1045
                %s1067 = sphi %s1055, %s1055
              $region143: #{spectral_conv3d.1} parent=139 // loop_header_branch
                %1064 = sbr.rel (%p1062) target = $region147
              $region144: #{spectral_conv3d.1} parent=139 // loop_body
                %v1068 = vld [vmem:[%s1066] sm:$0xff]
                %1069 = vst [vmem:[%s1067] sm:$0xff] %v1068
                %v1070 = vld [vmem:[%s1066 + $0x8] sm:$0xff]
                %1071 = vst [vmem:[%s1067 + $0x8] sm:$0xff] %v1070
                %v1072 = vld [vmem:[%s1066 + $0x10] sm:$0xff]
                %1073 = vst [vmem:[%s1067 + $0x20] sm:$0xff] %v1072
                %v1074 = vld [vmem:[%s1066 + $0x18] sm:$0xff]
                %1075 = vst [vmem:[%s1067 + $0x28] sm:$0xff] %v1074
              $region145: #{spectral_conv3d.1} parent=139 // loop_footer
                %s1065 = sadd.s32 1, %s1061
              $region146: #{spectral_conv3d.1} parent=139 // loop_footer_branch
                %1060 = sbr.rel target = $region142
              $region147: #{spectral_conv3d.1} parent=139 // loop_exit
                _
            $region140: #{spectral_conv3d.1} parent=135 // pred_fallthru
              _
            // Predicated region
            $region148: #{spectral_conv3d.1} parent=135 // pred_check
              _
            $region149: #{spectral_conv3d.1} parent=135 // pred_check_branch
              %1077 = sbr.rel target = $region151
            $region150: #{spectral_conv3d.1} parent=135 // pred_region
              _
            $region151: #{spectral_conv3d.1} parent=135 // pred_fallthru
              _
          $region136: #{spectral_conv3d.1} parent=131 // pred_fallthru
            _
          %1078 = vnop
        $region132: #{spectral_conv3d.1} parent=111 // pred_fallthru
          _
        // Predicated region
        $region152: #{spectral_conv3d.1} parent=111 // pred_check
          %p1079 = pneg %p185
        $region153: #{spectral_conv3d.1} parent=111 // pred_check_branch
          %1081 = sbr.rel (%p1079) target = $region155
        $region154: #{spectral_conv3d.1} parent=111 // pred_region
          %s1082 = smul.u32 2, %s21
          %s1083 = smul.addr %s1082, 8
          %s1084 = scalar_lea.vmem %s5, %s1083
          // Predicated region
          $region156: #{spectral_conv3d.1} parent=154 // pred_check
            _
          $region157: #{spectral_conv3d.1} parent=154 // pred_check_branch
            %1086 = sbr.rel (0) target = $region159
          $region158: #{spectral_conv3d.1} parent=154 // pred_region
            // Predicated region
            $region160: #{spectral_conv3d.1} parent=158 // pred_check
              _
            $region161: #{spectral_conv3d.1} parent=158 // pred_check_branch
              %1088 = sbr.rel (0) target = $region163
            $region162: #{spectral_conv3d.1} parent=158 // pred_region
              loop: start=0, step=1, limit=1
              $region164: #{spectral_conv3d.1} parent=162 // loop_pre_header
                _
              $region165: #{spectral_conv3d.1} parent=162 // loop_header
                %s1090 = sphi 0, %s1094
                %p1091 = scmp.ge.s32.totalorder %s1090, 1
                %s1095 = sphi %s1049, %s1049
                %s1096 = sphi %s1084, %s1084
              $region166: #{spectral_conv3d.1} parent=162 // loop_header_branch
                %1093 = sbr.rel (%p1091) target = $region170
              $region167: #{spectral_conv3d.1} parent=162 // loop_body
                %v1097 = vld [vmem:[%s1095] sm:$0xff]
                %1098 = vst [vmem:[%s1096] sm:$0xff] %v1097
                %v1099 = vld [vmem:[%s1095 + $0x8] sm:$0xff]
                %1100 = vst [vmem:[%s1096 + $0x8] sm:$0xff] %v1099
                %v1101 = vld [vmem:[%s1095 + $0x10] sm:$0xff]
                %1102 = vst [vmem:[%s1096 + $0x20] sm:$0xff] %v1101
                %v1103 = vld [vmem:[%s1095 + $0x18] sm:$0xff]
                %1104 = vst [vmem:[%s1096 + $0x28] sm:$0xff] %v1103
              $region168: #{spectral_conv3d.1} parent=162 // loop_footer
                %s1094 = sadd.s32 1, %s1090
              $region169: #{spectral_conv3d.1} parent=162 // loop_footer_branch
                %1089 = sbr.rel target = $region165
              $region170: #{spectral_conv3d.1} parent=162 // loop_exit
                _
            $region163: #{spectral_conv3d.1} parent=158 // pred_fallthru
              _
            // Predicated region
            $region171: #{spectral_conv3d.1} parent=158 // pred_check
              _
            $region172: #{spectral_conv3d.1} parent=158 // pred_check_branch
              %1106 = sbr.rel target = $region174
            $region173: #{spectral_conv3d.1} parent=158 // pred_region
              _
            $region174: #{spectral_conv3d.1} parent=158 // pred_fallthru
              _
          $region159: #{spectral_conv3d.1} parent=154 // pred_fallthru
            _
          %1107 = vnop
        $region155: #{spectral_conv3d.1} parent=111 // pred_fallthru
          _
      $region112: #{spectral_conv3d.1} parent=5 // pred_fallthru
        _
      %p1108 = scmp.le.s32.totalorder 2, %s12
      // Predicated region
      $region175: #{spectral_conv3d.1} parent=5 // pred_check
        %p1109 = pneg %p1108
      $region176: #{spectral_conv3d.1} parent=5 // pred_check_branch
        %1111 = sbr.rel (%p1109) target = $region178
      $region177: #{spectral_conv3d.1} parent=5 // pred_region
        %s1112 = ssub.s32 %s12, 2
        // Predicated region
        $region179: #{spectral_conv3d.1} parent=177 // pred_check
          %p1113 = pneg %p165
        $region180: #{spectral_conv3d.1} parent=177 // pred_check_branch
          %1115 = sbr.rel (%p1113) target = $region182
        $region181: #{spectral_conv3d.1} parent=177 // pred_region
          %s1116 = sand.u32 %s150, 1
          %s1117 = sand.u32 %s150, 1
          %s1118 = smul.addr %s1117, 32
          %s1119 = scalar_lea.vmem [#allocation6], %s1118
        $region182: #{spectral_conv3d.1} parent=177 // pred_fallthru
          _
        // Predicated region
        $region183: #{spectral_conv3d.1} parent=177 // pred_check
          %p1120 = pneg %p191
        $region184: #{spectral_conv3d.1} parent=177 // pred_check_branch
          %1122 = sbr.rel (%p1120) target = $region186
        $region185: #{spectral_conv3d.1} parent=177 // pred_region
          %s1123 = sand.u32 %s176, 1
          %s1124 = sand.u32 %s176, 1
          %s1125 = smul.addr %s1124, 32
          %s1126 = scalar_lea.vmem [#allocation7], %s1125
        $region186: #{spectral_conv3d.1} parent=177 // pred_fallthru
          _
      $region178: #{spectral_conv3d.1} parent=5 // pred_fallthru
        _
    $region6: #{spectral_conv3d.1} parent=1 // loop_footer
      %s16 = sadd.s32 1, %s12
    $region7: #{spectral_conv3d.1} parent=1 // loop_footer_branch
      %11 = sbr.rel target = $region3
    $region8: #{spectral_conv3d.1} parent=1 // loop_exit
      _

// kernel: reverse.1
$region0: #{reverse.1}
  #allocation0 [shape = 's32[1]{0}', space=sflag, size = 0x4, scoped, tag = 'scoped memory for reverse.1']
  %s0 = inlined_call_operand.vmem [shape: f32[2,4,16,16,7], index: 0, kind: input, shape index: {}]
  %s1 = inlined_call_operand.vmem [shape: f32[2,4,16,16,7], index: 1, kind: output, shape index: {}]
  %s2 = scalar_lea.vmem %s0, 96
  %v3 = vld [vmem:[%s2] sm:$0xff]
  %4 = vst [vmem:[%s1] sm:$0xff] %v3
  %s5 = scalar_lea.vmem %s0, 544
  %v6 = vld [vmem:[%s5] sm:$0xff]
  %s7 = scalar_lea.vmem %s1, 448
  %8 = vst [vmem:[%s7] sm:$0xff] %v6
  %s9 = scalar_lea.vmem %s0, 208
  %v10 = vld [vmem:[%s9] sm:$0xff]
  %s11 = scalar_lea.vmem %s1, 112
  %12 = vst [vmem:[%s11] sm:$0xff] %v10
  %s13 = scalar_lea.vmem %s0, 656
  %v14 = vld [vmem:[%s13] sm:$0xff]
  %s15 = scalar_lea.vmem %s1, 560
  %16 = vst [vmem:[%s15] sm:$0xff] %v14
  %s17 = scalar_lea.vmem %s0, 320
  %v18 = vld [vmem:[%s17] sm:$0xff]
  %s19 = scalar_lea.vmem %s1, 224
  %20 = vst [vmem:[%s19] sm:$0xff] %v18
  %s21 = scalar_lea.vmem %s0, 768
  %v22 = vld [vmem:[%s21] sm:$0xff]
  %s23 = scalar_lea.vmem %s1, 672
  %24 = vst [vmem:[%s23] sm:$0xff] %v22
  %s25 = scalar_lea.vmem %s0, 432
  %v26 = vld [vmem:[%s25] sm:$0xff]
  %s27 = scalar_lea.vmem %s1, 336
  %28 = vst [vmem:[%s27] sm:$0xff] %v26
  %s29 = scalar_lea.vmem %s0, 880
  %v30 = vld [vmem:[%s29] sm:$0xff]
  %s31 = scalar_lea.vmem %s1, 784
  %32 = vst [vmem:[%s31] sm:$0xff] %v30
  %s33 = scalar_lea.vmem %s0, 80
  %v34 = vld [vmem:[%s33] sm:$0xff]
  %s35 = scalar_lea.vmem %s1, 16
  %36 = vst [vmem:[%s35] sm:$0xff] %v34
  %s37 = scalar_lea.vmem %s0, 528
  %v38 = vld [vmem:[%s37] sm:$0xff]
  %s39 = scalar_lea.vmem %s1, 464
  %40 = vst [vmem:[%s39] sm:$0xff] %v38
  %s41 = scalar_lea.vmem %s0, 192
  %v42 = vld [vmem:[%s41] sm:$0xff]
  %s43 = scalar_lea.vmem %s1, 128
  %44 = vst [vmem:[%s43] sm:$0xff] %v42
  %s45 = scalar_lea.vmem %s0, 640
  %v46 = vld [vmem:[%s45] sm:$0xff]
  %s47 = scalar_lea.vmem %s1, 576
  %48 = vst [vmem:[%s47] sm:$0xff] %v46
  %s49 = scalar_lea.vmem %s0, 304
  %v50 = vld [vmem:[%s49] sm:$0xff]
  %s51 = scalar_lea.vmem %s1, 240
  %52 = vst [vmem:[%s51] sm:$0xff] %v50
  %s53 = scalar_lea.vmem %s0, 752
  %v54 = vld [vmem:[%s53] sm:$0xff]
  %s55 = scalar_lea.vmem %s1, 688
  %56 = vst [vmem:[%s55] sm:$0xff] %v54
  %s57 = scalar_lea.vmem %s0, 416
  %v58 = vld [vmem:[%s57] sm:$0xff]
  %s59 = scalar_lea.vmem %s1, 352
  %60 = vst [vmem:[%s59] sm:$0xff] %v58
  %s61 = scalar_lea.vmem %s0, 864
  %v62 = vld [vmem:[%s61] sm:$0xff]
  %s63 = scalar_lea.vmem %s1, 800
  %64 = vst [vmem:[%s63] sm:$0xff] %v62
  %s65 = scalar_lea.vmem %s0, 64
  %v66 = vld [vmem:[%s65] sm:$0xff]
  %s67 = scalar_lea.vmem %s1, 32
  %68 = vst [vmem:[%s67] sm:$0xff] %v66
  %s69 = scalar_lea.vmem %s0, 512
  %v70 = vld [vmem:[%s69] sm:$0xff]
  %s71 = scalar_lea.vmem %s1, 480
  %72 = vst [vmem:[%s71] sm:$0xff] %v70
  %s73 = scalar_lea.vmem %s0, 176
  %v74 = vld [vmem:[%s73] sm:$0xff]
  %s75 = scalar_lea.vmem %s1, 144
  %76 = vst [vmem:[%s75] sm:$0xff] %v74
  %s77 = scalar_lea.vmem %s0, 624
  %v78 = vld [vmem:[%s77] sm:$0xff]
  %s79 = scalar_lea.vmem %s1, 592
  %80 = vst [vmem:[%s79] sm:$0xff] %v78
  %s81 = scalar_lea.vmem %s0, 288
  %v82 = vld [vmem:[%s81] sm:$0xff]
  %s83 = scalar_lea.vmem %s1, 256
  %84 = vst [vmem:[%s83] sm:$0xff] %v82
  %s85 = scalar_lea.vmem %s0, 736
  %v86 = vld [vmem:[%s85] sm:$0xff]
  %s87 = scalar_lea.vmem %s1, 704
  %88 = vst [vmem:[%s87] sm:$0xff] %v86
  %s89 = scalar_lea.vmem %s0, 400
  %v90 = vld [vmem:[%s89] sm:$0xff]
  %s91 = scalar_lea.vmem %s1, 368
  %92 = vst [vmem:[%s91] sm:$0xff] %v90
  %s93 = scalar_lea.vmem %s0, 848
  %v94 = vld [vmem:[%s93] sm:$0xff]
  %s95 = scalar_lea.vmem %s1, 816
  %96 = vst [vmem:[%s95] sm:$0xff] %v94
  %s97 = scalar_lea.vmem %s0, 48
  %v98 = vld [vmem:[%s97] sm:$0xff]
  %s99 = scalar_lea.vmem %s1, 48
  %100 = vst [vmem:[%s99] sm:$0xff] %v98
  %s101 = scalar_lea.vmem %s0, 496
  %v102 = vld [vmem:[%s101] sm:$0xff]
  %s103 = scalar_lea.vmem %s1, 496
  %104 = vst [vmem:[%s103] sm:$0xff] %v102
  %s105 = scalar_lea.vmem %s0, 160
  %v106 = vld [vmem:[%s105] sm:$0xff]
  %s107 = scalar_lea.vmem %s1, 160
  %108 = vst [vmem:[%s107] sm:$0xff] %v106
  %s109 = scalar_lea.vmem %s0, 608
  %v110 = vld [vmem:[%s109] sm:$0xff]
  %s111 = scalar_lea.vmem %s1, 608
  %112 = vst [vmem:[%s111] sm:$0xff] %v110
  %s113 = scalar_lea.vmem %s0, 272
  %v114 = vld [vmem:[%s113] sm:$0xff]
  %s115 = scalar_lea.vmem %s1, 272
  %116 = vst [vmem:[%s115] sm:$0xff] %v114
  %s117 = scalar_lea.vmem %s0, 720
  %v118 = vld [vmem:[%s117] sm:$0xff]
  %s119 = scalar_lea.vmem %s1, 720
  %120 = vst [vmem:[%s119] sm:$0xff] %v118
  %s121 = scalar_lea.vmem %s0, 384
  %v122 = vld [vmem:[%s121] sm:$0xff]
  %s123 = scalar_lea.vmem %s1, 384
  %124 = vst [vmem:[%s123] sm:$0xff] %v122
  %s125 = scalar_lea.vmem %s0, 832
  %v126 = vld [vmem:[%s125] sm:$0xff]
  %s127 = scalar_lea.vmem %s1, 832
  %128 = vst [vmem:[%s127] sm:$0xff] %v126
  %s129 = scalar_lea.vmem %s0, 32
  %v130 = vld [vmem:[%s129] sm:$0xff]
  %s131 = scalar_lea.vmem %s1, 64
  %132 = vst [vmem:[%s131] sm:$0xff] %v130
  %s133 = scalar_lea.vmem %s0, 480
  %v134 = vld [vmem:[%s133] sm:$0xff]
  %s135 = scalar_lea.vmem %s1, 512
  %136 = vst [vmem:[%s135] sm:$0xff] %v134
  %s137 = scalar_lea.vmem %s0, 144
  %v138 = vld [vmem:[%s137] sm:$0xff]
  %s139 = scalar_lea.vmem %s1, 176
  %140 = vst [vmem:[%s139] sm:$0xff] %v138
  %s141 = scalar_lea.vmem %s0, 592
  %v142 = vld [vmem:[%s141] sm:$0xff]
  %s143 = scalar_lea.vmem %s1, 624
  %144 = vst [vmem:[%s143] sm:$0xff] %v142
  %s145 = scalar_lea.vmem %s0, 256
  %v146 = vld [vmem:[%s145] sm:$0xff]
  %s147 = scalar_lea.vmem %s1, 288
  %148 = vst [vmem:[%s147] sm:$0xff] %v146
  %s149 = scalar_lea.vmem %s0, 704
  %v150 = vld [vmem:[%s149] sm:$0xff]
  %s151 = scalar_lea.vmem %s1, 736
  %152 = vst [vmem:[%s151] sm:$0xff] %v150
  %s153 = scalar_lea.vmem %s0, 368
  %v154 = vld [vmem:[%s153] sm:$0xff]
  %s155 = scalar_lea.vmem %s1, 400
  %156 = vst [vmem:[%s155] sm:$0xff] %v154
  %s157 = scalar_lea.vmem %s0, 816
  %v158 = vld [vmem:[%s157] sm:$0xff]
  %s159 = scalar_lea.vmem %s1, 848
  %160 = vst [vmem:[%s159] sm:$0xff] %v158
  %s161 = scalar_lea.vmem %s0, 16
  %v162 = vld [vmem:[%s161] sm:$0xff]
  %s163 = scalar_lea.vmem %s1, 80
  %164 = vst [vmem:[%s163] sm:$0xff] %v162
  %s165 = scalar_lea.vmem %s0, 464
  %v166 = vld [vmem:[%s165] sm:$0xff]
  %s167 = scalar_lea.vmem %s1, 528
  %168 = vst [vmem:[%s167] sm:$0xff] %v166
  %s169 = scalar_lea.vmem %s0, 128
  %v170 = vld [vmem:[%s169] sm:$0xff]
  %s171 = scalar_lea.vmem %s1, 192
  %172 = vst [vmem:[%s171] sm:$0xff] %v170
  %s173 = scalar_lea.vmem %s0, 576
  %v174 = vld [vmem:[%s173] sm:$0xff]
  %s175 = scalar_lea.vmem %s1, 640
  %176 = vst [vmem:[%s175] sm:$0xff] %v174
  %s177 = scalar_lea.vmem %s0, 240
  %v178 = vld [vmem:[%s177] sm:$0xff]
  %s179 = scalar_lea.vmem %s1, 304
  %180 = vst [vmem:[%s179] sm:$0xff] %v178
  %s181 = scalar_lea.vmem %s0, 688
  %v182 = vld [vmem:[%s181] sm:$0xff]
  %s183 = scalar_lea.vmem %s1, 752
  %184 = vst [vmem:[%s183] sm:$0xff] %v182
  %s185 = scalar_lea.vmem %s0, 352
  %v186 = vld [vmem:[%s185] sm:$0xff]
  %s187 = scalar_lea.vmem %s1, 416
  %188 = vst [vmem:[%s187] sm:$0xff] %v186
  %s189 = scalar_lea.vmem %s0, 800
  %v190 = vld [vmem:[%s189] sm:$0xff]
  %s191 = scalar_lea.vmem %s1, 864
  %192 = vst [vmem:[%s191] sm:$0xff] %v190
  %v193 = vld [vmem:[%s0] sm:$0xff]
  %s194 = scalar_lea.vmem %s1, 96
  %195 = vst [vmem:[%s194] sm:$0xff] %v193
  %s196 = scalar_lea.vmem %s0, 448
  %v197 = vld [vmem:[%s196] sm:$0xff]
  %s198 = scalar_lea.vmem %s1, 544
  %199 = vst [vmem:[%s198] sm:$0xff] %v197
  %s200 = scalar_lea.vmem %s0, 112
  %v201 = vld [vmem:[%s200] sm:$0xff]
  %s202 = scalar_lea.vmem %s1, 208
  %203 = vst [vmem:[%s202] sm:$0xff] %v201
  %s204 = scalar_lea.vmem %s0, 560
  %v205 = vld [vmem:[%s204] sm:$0xff]
  %s206 = scalar_lea.vmem %s1, 656
  %207 = vst [vmem:[%s206] sm:$0xff] %v205
  %s208 = scalar_lea.vmem %s0, 224
  %v209 = vld [vmem:[%s208] sm:$0xff]
  %s210 = scalar_lea.vmem %s1, 320
  %211 = vst [vmem:[%s210] sm:$0xff] %v209
  %s212 = scalar_lea.vmem %s0, 672
  %v213 = vld [vmem:[%s212] sm:$0xff]
  %s214 = scalar_lea.vmem %s1, 768
  %215 = vst [vmem:[%s214] sm:$0xff] %v213
  %s216 = scalar_lea.vmem %s0, 336
  %v217 = vld [vmem:[%s216] sm:$0xff]
  %s218 = scalar_lea.vmem %s1, 432
  %219 = vst [vmem:[%s218] sm:$0xff] %v217
  %s220 = scalar_lea.vmem %s0, 784
  %v221 = vld [vmem:[%s220] sm:$0xff]
  %s222 = scalar_lea.vmem %s1, 880
  %223 = vst [vmem:[%s222] sm:$0xff] %v221
  %s224 = scalar_lea.vmem %s0, 104
  %v225 = vld [vmem:[%s224] sm:$0xff]
  %s226 = scalar_lea.vmem %s1, 8
  %227 = vst [vmem:[%s226] sm:$0xff] %v225
  %s228 = scalar_lea.vmem %s0, 552
  %v229 = vld [vmem:[%s228] sm:$0xff]
  %s230 = scalar_lea.vmem %s1, 456
  %231 = vst [vmem:[%s230] sm:$0xff] %v229
  %s232 = scalar_lea.vmem %s0, 216
  %v233 = vld [vmem:[%s232] sm:$0xff]
  %s234 = scalar_lea.vmem %s1, 120
  %235 = vst [vmem:[%s234] sm:$0xff] %v233
  %s236 = scalar_lea.vmem %s0, 664
  %v237 = vld [vmem:[%s236] sm:$0xff]
  %s238 = scalar_lea.vmem %s1, 568
  %239 = vst [vmem:[%s238] sm:$0xff] %v237
  %s240 = scalar_lea.vmem %s0, 328
  %v241 = vld [vmem:[%s240] sm:$0xff]
  %s242 = scalar_lea.vmem %s1, 232
  %243 = vst [vmem:[%s242] sm:$0xff] %v241
  %s244 = scalar_lea.vmem %s0, 776
  %v245 = vld [vmem:[%s244] sm:$0xff]
  %s246 = scalar_lea.vmem %s1, 680
  %247 = vst [vmem:[%s246] sm:$0xff] %v245
  %s248 = scalar_lea.vmem %s0, 440
  %v249 = vld [vmem:[%s248] sm:$0xff]
  %s250 = scalar_lea.vmem %s1, 344
  %251 = vst [vmem:[%s250] sm:$0xff] %v249
  %s252 = scalar_lea.vmem %s0, 888
  %v253 = vld [vmem:[%s252] sm:$0xff]
  %s254 = scalar_lea.vmem %s1, 792
  %255 = vst [vmem:[%s254] sm:$0xff] %v253
  %s256 = scalar_lea.vmem %s0, 88
  %v257 = vld [vmem:[%s256] sm:$0xff]
  %s258 = scalar_lea.vmem %s1, 24
  %259 = vst [vmem:[%s258] sm:$0xff] %v257
  %s260 = scalar_lea.vmem %s0, 536
  %v261 = vld [vmem:[%s260] sm:$0xff]
  %s262 = scalar_lea.vmem %s1, 472
  %263 = vst [vmem:[%s262] sm:$0xff] %v261
  %s264 = scalar_lea.vmem %s0, 200
  %v265 = vld [vmem:[%s264] sm:$0xff]
  %s266 = scalar_lea.vmem %s1, 136
  %267 = vst [vmem:[%s266] sm:$0xff] %v265
  %s268 = scalar_lea.vmem %s0, 648
  %v269 = vld [vmem:[%s268] sm:$0xff]
  %s270 = scalar_lea.vmem %s1, 584
  %271 = vst [vmem:[%s270] sm:$0xff] %v269
  %s272 = scalar_lea.vmem %s0, 312
  %v273 = vld [vmem:[%s272] sm:$0xff]
  %s274 = scalar_lea.vmem %s1, 248
  %275 = vst [vmem:[%s274] sm:$0xff] %v273
  %s276 = scalar_lea.vmem %s0, 760
  %v277 = vld [vmem:[%s276] sm:$0xff]
  %s278 = scalar_lea.vmem %s1, 696
  %279 = vst [vmem:[%s278] sm:$0xff] %v277
  %s280 = scalar_lea.vmem %s0, 424
  %v281 = vld [vmem:[%s280] sm:$0xff]
  %s282 = scalar_lea.vmem %s1, 360
  %283 = vst [vmem:[%s282] sm:$0xff] %v281
  %s284 = scalar_lea.vmem %s0, 872
  %v285 = vld [vmem:[%s284] sm:$0xff]
  %s286 = scalar_lea.vmem %s1, 808
  %287 = vst [vmem:[%s286] sm:$0xff] %v285
  %s288 = scalar_lea.vmem %s0, 72
  %v289 = vld [vmem:[%s288] sm:$0xff]
  %s290 = scalar_lea.vmem %s1, 40
  %291 = vst [vmem:[%s290] sm:$0xff] %v289
  %s292 = scalar_lea.vmem %s0, 520
  %v293 = vld [vmem:[%s292] sm:$0xff]
  %s294 = scalar_lea.vmem %s1, 488
  %295 = vst [vmem:[%s294] sm:$0xff] %v293
  %s296 = scalar_lea.vmem %s0, 184
  %v297 = vld [vmem:[%s296] sm:$0xff]
  %s298 = scalar_lea.vmem %s1, 152
  %299 = vst [vmem:[%s298] sm:$0xff] %v297
  %s300 = scalar_lea.vmem %s0, 632
  %v301 = vld [vmem:[%s300] sm:$0xff]
  %s302 = scalar_lea.vmem %s1, 600
  %303 = vst [vmem:[%s302] sm:$0xff] %v301
  %s304 = scalar_lea.vmem %s0, 296
  %v305 = vld [vmem:[%s304] sm:$0xff]
  %s306 = scalar_lea.vmem %s1, 264
  %307 = vst [vmem:[%s306] sm:$0xff] %v305
  %s308 = scalar_lea.vmem %s0, 744
  %v309 = vld [vmem:[%s308] sm:$0xff]
  %s310 = scalar_lea.vmem %s1, 712
  %311 = vst [vmem:[%s310] sm:$0xff] %v309
  %s312 = scalar_lea.vmem %s0, 408
  %v313 = vld [vmem:[%s312] sm:$0xff]
  %s314 = scalar_lea.vmem %s1, 376
  %315 = vst [vmem:[%s314] sm:$0xff] %v313
  %s316 = scalar_lea.vmem %s0, 856
  %v317 = vld [vmem:[%s316] sm:$0xff]
  %s318 = scalar_lea.vmem %s1, 824
  %319 = vst [vmem:[%s318] sm:$0xff] %v317
  %s320 = scalar_lea.vmem %s0, 56
  %v321 = vld [vmem:[%s320] sm:$0xff]
  %s322 = scalar_lea.vmem %s1, 56
  %323 = vst [vmem:[%s322] sm:$0xff] %v321
  %s324 = scalar_lea.vmem %s0, 504
  %v325 = vld [vmem:[%s324] sm:$0xff]
  %s326 = scalar_lea.vmem %s1, 504
  %327 = vst [vmem:[%s326] sm:$0xff] %v325
  %s328 = scalar_lea.vmem %s0, 168
  %v329 = vld [vmem:[%s328] sm:$0xff]
  %s330 = scalar_lea.vmem %s1, 168
  %331 = vst [vmem:[%s330] sm:$0xff] %v329
  %s332 = scalar_lea.vmem %s0, 616
  %v333 = vld [vmem:[%s332] sm:$0xff]
  %s334 = scalar_lea.vmem %s1, 616
  %335 = vst [vmem:[%s334] sm:$0xff] %v333
  %s336 = scalar_lea.vmem %s0, 280
  %v337 = vld [vmem:[%s336] sm:$0xff]
  %s338 = scalar_lea.vmem %s1, 280
  %339 = vst [vmem:[%s338] sm:$0xff] %v337
  %s340 = scalar_lea.vmem %s0, 728
  %v341 = vld [vmem:[%s340] sm:$0xff]
  %s342 = scalar_lea.vmem %s1, 728
  %343 = vst [vmem:[%s342] sm:$0xff] %v341
  %s344 = scalar_lea.vmem %s0, 392
  %v345 = vld [vmem:[%s344] sm:$0xff]
  %s346 = scalar_lea.vmem %s1, 392
  %347 = vst [vmem:[%s346] sm:$0xff] %v345
  %s348 = scalar_lea.vmem %s0, 840
  %v349 = vld [vmem:[%s348] sm:$0xff]
  %s350 = scalar_lea.vmem %s1, 840
  %351 = vst [vmem:[%s350] sm:$0xff] %v349
  %s352 = scalar_lea.vmem %s0, 40
  %v353 = vld [vmem:[%s352] sm:$0xff]
  %s354 = scalar_lea.vmem %s1, 72
  %355 = vst [vmem:[%s354] sm:$0xff] %v353
  %s356 = scalar_lea.vmem %s0, 488
  %v357 = vld [vmem:[%s356] sm:$0xff]
  %s358 = scalar_lea.vmem %s1, 520
  %359 = vst [vmem:[%s358] sm:$0xff] %v357
  %s360 = scalar_lea.vmem %s0, 152
  %v361 = vld [vmem:[%s360] sm:$0xff]
  %s362 = scalar_lea.vmem %s1, 184
  %363 = vst [vmem:[%s362] sm:$0xff] %v361
  %s364 = scalar_lea.vmem %s0, 600
  %v365 = vld [vmem:[%s364] sm:$0xff]
  %s366 = scalar_lea.vmem %s1, 632
  %367 = vst [vmem:[%s366] sm:$0xff] %v365
  %s368 = scalar_lea.vmem %s0, 264
  %v369 = vld [vmem:[%s368] sm:$0xff]
  %s370 = scalar_lea.vmem %s1, 296
  %371 = vst [vmem:[%s370] sm:$0xff] %v369
  %s372 = scalar_lea.vmem %s0, 712
  %v373 = vld [vmem:[%s372] sm:$0xff]
  %s374 = scalar_lea.vmem %s1, 744
  %375 = vst [vmem:[%s374] sm:$0xff] %v373
  %s376 = scalar_lea.vmem %s0, 376
  %v377 = vld [vmem:[%s376] sm:$0xff]
  %s378 = scalar_lea.vmem %s1, 408
  %379 = vst [vmem:[%s378] sm:$0xff] %v377
  %s380 = scalar_lea.vmem %s0, 824
  %v381 = vld [vmem:[%s380] sm:$0xff]
  %s382 = scalar_lea.vmem %s1, 856
  %383 = vst [vmem:[%s382] sm:$0xff] %v381
  %s384 = scalar_lea.vmem %s0, 24
  %v385 = vld [vmem:[%s384] sm:$0xff]
  %s386 = scalar_lea.vmem %s1, 88
  %387 = vst [vmem:[%s386] sm:$0xff] %v385
  %s388 = scalar_lea.vmem %s0, 472
  %v389 = vld [vmem:[%s388] sm:$0xff]
  %s390 = scalar_lea.vmem %s1, 536
  %391 = vst [vmem:[%s390] sm:$0xff] %v389
  %s392 = scalar_lea.vmem %s0, 136
  %v393 = vld [vmem:[%s392] sm:$0xff]
  %s394 = scalar_lea.vmem %s1, 200
  %395 = vst [vmem:[%s394] sm:$0xff] %v393
  %s396 = scalar_lea.vmem %s0, 584
  %v397 = vld [vmem:[%s396] sm:$0xff]
  %s398 = scalar_lea.vmem %s1, 648
  %399 = vst [vmem:[%s398] sm:$0xff] %v397
  %s400 = scalar_lea.vmem %s0, 248
  %v401 = vld [vmem:[%s400] sm:$0xff]
  %s402 = scalar_lea.vmem %s1, 312
  %403 = vst [vmem:[%s402] sm:$0xff] %v401
  %s404 = scalar_lea.vmem %s0, 696
  %v405 = vld [vmem:[%s404] sm:$0xff]
  %s406 = scalar_lea.vmem %s1, 760
  %407 = vst [vmem:[%s406] sm:$0xff] %v405
  %s408 = scalar_lea.vmem %s0, 360
  %v409 = vld [vmem:[%s408] sm:$0xff]
  %s410 = scalar_lea.vmem %s1, 424
  %411 = vst [vmem:[%s410] sm:$0xff] %v409
  %s412 = scalar_lea.vmem %s0, 808
  %v413 = vld [vmem:[%s412] sm:$0xff]
  %s414 = scalar_lea.vmem %s1, 872
  %415 = vst [vmem:[%s414] sm:$0xff] %v413
  %s416 = scalar_lea.vmem %s0, 8
  %v417 = vld [vmem:[%s416] sm:$0xff]
  %s418 = scalar_lea.vmem %s1, 104
  %419 = vst [vmem:[%s418] sm:$0xff] %v417
  %s420 = scalar_lea.vmem %s0, 456
  %v421 = vld [vmem:[%s420] sm:$0xff]
  %s422 = scalar_lea.vmem %s1, 552
  %423 = vst [vmem:[%s422] sm:$0xff] %v421
  %s424 = scalar_lea.vmem %s0, 120
  %v425 = vld [vmem:[%s424] sm:$0xff]
  %s426 = scalar_lea.vmem %s1, 216
  %427 = vst [vmem:[%s426] sm:$0xff] %v425
  %s428 = scalar_lea.vmem %s0, 568
  %v429 = vld [vmem:[%s428] sm:$0xff]
  %s430 = scalar_lea.vmem %s1, 664
  %431 = vst [vmem:[%s430] sm:$0xff] %v429
  %s432 = scalar_lea.vmem %s0, 232
  %v433 = vld [vmem:[%s432] sm:$0xff]
  %s434 = scalar_lea.vmem %s1, 328
  %435 = vst [vmem:[%s434] sm:$0xff] %v433
  %s436 = scalar_lea.vmem %s0, 680
  %v437 = vld [vmem:[%s436] sm:$0xff]
  %s438 = scalar_lea.vmem %s1, 776
  %439 = vst [vmem:[%s438] sm:$0xff] %v437
  %s440 = scalar_lea.vmem %s0, 344
  %v441 = vld [vmem:[%s440] sm:$0xff]
  %s442 = scalar_lea.vmem %s1, 440
  %443 = vst [vmem:[%s442] sm:$0xff] %v441
  %s444 = scalar_lea.vmem %s0, 792
  %v445 = vld [vmem:[%s444] sm:$0xff]
  %s446 = scalar_lea.vmem %s1, 888
  %447 = vst [vmem:[%s446] sm:$0xff] %v445

</llo_original>
